<compile_context>
chip_gen: v7x
topology: tpu7x:2x2x1
jax: 0.10.0
libtpu: 0.0.40
codegen_flags: <defaults>
</compile_context>

<pallas_src>
import functools

import jax
import jax.numpy as jnp
from jax.experimental import pallas as pl
from jax.experimental.pallas import tpu as pltpu


def _stable_sigmoid(z):
    # Overflow-free sigmoid: e = exp(-|z|) in (0, 1], so 1+e in (1, 2] and the
    # EUP approximate reciprocal is well conditioned (perf-review item).
    e = jnp.exp(-jnp.abs(z))
    r = pl.reciprocal(1.0 + e, approx=True)
    return jnp.where(z >= 0.0, r, e * r)


def _clip_modality_kernel(a_ref, b_ref, out_ref, *, n, tile_rows,
                          n_tiles_per_mod, with_modality_loss):
    """One grid step = one row tile of the virtual (2N, 2N) Z = X @ X.T."""
    i = pl.program_id(0)
    is_a = i < n_tiles_per_mod                        # which modality owns the rows
    local = jnp.where(is_a, i, i - n_tiles_per_mod)   # tile index within modality
    start = pl.multiple_of(local * tile_rows, 128)    # row offset within modality

    a_all = a_ref[...]                                # (N_pad, D_pad), resident
    b_all = b_ref[...]
    rows_a = a_ref[pl.ds(start, tile_rows), :]        # (TR, D_pad), caller dtype
    rows_b = b_ref[pl.ds(start, tile_rows), :]
    rows = jnp.where(is_a, rows_a, rows_b)            # row tile of X

    # Two MXU matmuls give the full (TR, 2*N_pad) row slab of Z = X @ X.T.
    # Contract on the feature dim of both operands (attention-style q@k.T).
    dn = (((1,), (1,)), ((), ()))
    l_vs_a = jax.lax.dot_general(rows, a_all, dn, preferred_element_type=jnp.float32)
    l_vs_b = jax.lax.dot_general(rows, b_all, dn, preferred_element_type=jnp.float32)
    l_cross = jnp.where(is_a, l_vs_b, l_vs_a)         # == CLIP logits rows (reused)
    l_same = jnp.where(is_a, l_vs_a, l_vs_b)          # same-modality block of Z

    n_pad = l_cross.shape[1]
    # Per-tile index / validity masks, fused into the expressions below.
    row_id = start + jax.lax.broadcasted_iota(jnp.int32, (tile_rows, 1), 0)
    col_id = jax.lax.broadcasted_iota(jnp.int32, (1, n_pad), 1)
    row_valid = row_id < n                            # (TR, 1)
    col_valid = col_id < n                            # (1, N_pad)

    # ---------------- CLIP pair CE (rows of a@b.T and of b@a.T) -------------
    # Diagonal of the pair logits is <a_i, b_i>: O(TR*D) VPU work, no masks.
    diag = jnp.sum(rows_a.astype(jnp.float32) * rows_b.astype(jnp.float32),
                   axis=1, keepdims=True)             # (TR, 1)
    masked = jnp.where(col_valid, l_cross, jnp.float32(-1e30))
    m = jnp.max(masked, axis=1, keepdims=True)
    lse = m + jnp.log(jnp.sum(jnp.exp(masked - m), axis=1, keepdims=True))
    ce_partial = jnp.sum(jnp.where(row_valid, lse - diag, 0.0))

    # ---------------- modality (intra/inter sample) loss ---------------------
    if with_modality_loss:
        is_diag = col_id == row_id                    # Z diagonal lives in l_same
        # positives: diag + upper-triangular pairs inside the same modality
        t_pos = ((col_id >= row_id) & col_valid).astype(jnp.float32)

        s_same = jnp.where(is_diag, jnp.float32(1.0), _stable_sigmoid(l_same))
        s_cross = _stable_sigmoid(l_cross)

        # BCEWithLogits(input=s, target=t) with s in [0,1]:
        #   s*(1-t) + log(1+exp(-s))     (== log1p(exp(-s)) for exp(-s) in [1/e,1])
        elem_same = s_same * (1.0 - t_pos) + jnp.log(1.0 + jnp.exp(-s_same))
        elem_cross = s_cross + jnp.log(1.0 + jnp.exp(-s_cross))   # target == 0
        elem_same = jnp.where(col_valid, elem_same, 0.0)
        elem_cross = jnp.where(col_valid, elem_cross, 0.0)

        loss_pos = jnp.sum(elem_same * t_pos, axis=1, keepdims=True)
        row_total = (jnp.sum(elem_same, axis=1, keepdims=True)
                     + jnp.sum(elem_cross, axis=1, keepdims=True))
        loss_neg = row_total - loss_pos               # no (1-t)-weighted pass

        num_pos = jnp.maximum((n - row_id).astype(jnp.float32), 1.0)  # closed form
        num_neg = jnp.maximum(jnp.float32(2 * n) - num_pos, 1.0)
        row_loss = (loss_pos * pl.reciprocal(num_pos, approx=True)
                    + loss_neg * pl.reciprocal(num_neg, approx=True))
        mod_partial = jnp.sum(jnp.where(row_valid, row_loss, 0.0))
    else:
        mod_partial = jnp.float32(0.0)

    # Lane-dense (1,8,128) partial-sum block: [0,0,0]=CE sum, [0,0,1]=modality sum.
    r8 = jax.lax.broadcasted_iota(jnp.int32, (8, 128), 0)
    c128 = jax.lax.broadcasted_iota(jnp.int32, (8, 128), 1)
    blk = jnp.where((r8 == 0) & (c128 == 0), ce_partial, jnp.float32(0.0))
    blk = blk + jnp.where((r8 == 0) & (c128 == 1), mod_partial, jnp.float32(0.0))
    out_ref[...] = blk[None, :, :]


def clip_loss_with_modality_loss(emb_a, emb_b, *, l2_normalize=False,
                                 modality_loss=True, tile_rows=128):
    """Single-process CLIPLossWithModalityLoss forward (two modalities)."""
    assert emb_a.shape == emb_b.shape and emb_a.ndim == 2
    assert tile_rows % 128 == 0, "tile_rows must be a multiple of 128"
    n, d = emb_a.shape

    if l2_normalize:  # wrapper glue (module default is False)
        emb_a = emb_a / jnp.linalg.norm(emb_a, axis=-1, keepdims=True)
        emb_b = emb_b / jnp.linalg.norm(emb_b, axis=-1, keepdims=True)

    # Zero-pad batch/feature dims to multiples of 128 so the matmul slabs are
    # lane-dense; padded rows/cols are masked out of every reduction in-kernel.
    n_pad = ((n + tile_rows - 1) // tile_rows) * tile_rows
    d_pad = ((d + 127) // 128) * 128
    a = jnp.pad(emb_a, ((0, n_pad - n), (0, d_pad - d)))
    b = jnp.pad(emb_b, ((0, n_pad - n), (0, d_pad - d)))

    n_tiles_per_mod = n_pad // tile_rows
    num_tiles = 2 * n_tiles_per_mod          # a-row tiles, then b-row tiles

    kernel = functools.partial(
        _clip_modality_kernel, n=n, tile_rows=tile_rows,
        n_tiles_per_mod=n_tiles_per_mod, with_modality_loss=modality_loss)

    # TODO(synk): for very large N*D (resident a/b + the (TR, N_pad) slabs no
    # longer fit the VMEM budget) the column dimension must also be tiled with
    # an online LSE / chunked BCE accumulation.
    partials = pl.pallas_call(
        kernel,
        out_shape=jax.ShapeDtypeStruct((num_tiles, 8, 128), jnp.float32),
        grid=(num_tiles,),
        in_specs=[
            pl.BlockSpec((n_pad, d_pad), lambda i: (0, 0)),   # a resident in VMEM
            pl.BlockSpec((n_pad, d_pad), lambda i: (0, 0)),   # b resident in VMEM
        ],
        out_specs=pl.BlockSpec((1, 8, 128), lambda i: (i, 0, 0)),
        compiler_params=pltpu.CompilerParams(
            dimension_semantics=("parallel",),   # independent tiles -> 2 TCs on v7x
            vmem_limit_bytes=48 * 1024 * 1024,   # below v7x's 64 MiB physical VMEM
        ),
    )(a, b)

    ce_sum = jnp.sum(partials[:, 0, 0])
    total = 0.5 * ce_sum / n                 # 0.5 * (mean CE_a + mean CE_b)
    if modality_loss:
        total = total + jnp.sum(partials[:, 0, 1]) / (2 * n)
    return total


def _reference(a, b):
    """Pure-JAX reference mirroring the PyTorch forward (world_size=1)."""
    n = a.shape[0]
    logits = a @ b.T
    idx = jnp.arange(n)
    ce = lambda lg: jnp.mean(jax.nn.logsumexp(lg, axis=1) - lg[idx, idx])
    pair = 0.5 * (ce(logits) + ce(logits.T))

    x = jnp.concatenate([a, b], axis=0)
    t = x.shape[0]
    z = x @ x.T
    r = jnp.arange(t)[:, None]
    c = jnp.arange(t)[None, :]
    is_diag = r == c
    same_block = (r < n) == (c < n)
    target = jnp.where(is_diag | (same_block & (r < c)), 1.0, 0.0)
    s = jnp.where(is_diag, 1.0, jax.nn.sigmoid(z))
    elem = s * (1.0 - target) + jnp.log1p(jnp.exp(-s))
    loss_pos = jnp.sum(elem * target, axis=1)
    loss_neg = jnp.sum(elem * (1.0 - target), axis=1)
    num_pos = jnp.sum(target, axis=1)
    num_neg = t - num_pos
    return pair + jnp.mean(loss_pos / num_pos + loss_neg / num_neg)


if __name__ == "__main__":
    key = jax.random.PRNGKey(0)
    k_a, k_b = jax.random.split(key)
    N, D = 8, 32  # batch of 8 samples, 32-dim embeddings, two modalities
    emb_a = jax.random.normal(k_a, (N, D), dtype=jnp.float32)  # e.g. "text"
    emb_b = jax.random.normal(k_b, (N, D), dtype=jnp.float32)  # e.g. "rgb"

    loss = clip_loss_with_modality_loss(emb_a, emb_b)
    loss = jax.block_until_ready(loss)

    ref = jax.block_until_ready(_reference(emb_a, emb_b))
    # Tolerance allows for the EUP approximate reciprocals (pl.reciprocal
    # approx=True) requested by the perf review; any mask/formula bug would be
    # orders of magnitude larger.
    assert jnp.allclose(loss, ref, rtol=2e-3, atol=2e-3), (loss, ref)

    print("KERNEL_OK")
</pallas_src>

<mosaic_0001>
module attributes {stable_mosaic.version = 11 : i64} {
  func.func @_clip_modality_kernel(%arg0: i32, %arg1: memref<128x128xf32, #tpu.memory_space<vmem>>, %arg2: memref<128x128xf32, #tpu.memory_space<vmem>>, %arg3: memref<1x8x128xf32, #tpu.memory_space<vmem>>) attributes {dimension_semantics = [#tpu.dimension_semantics<parallel>], iteration_bounds = array<i64: 2>, scalar_prefetch = 0 : i64, scratch_operands = 0 : i64, tpu.core_type = #tpu.core_type<tc>, window_params = [{pipeline_mode = #tpu.pipeline_mode<synchronous>, transform_indices = @transform_0, window_bounds = array<i64: 128, 128>}, {pipeline_mode = #tpu.pipeline_mode<synchronous>, transform_indices = @transform_1, window_bounds = array<i64: 128, 128>}, {transform_indices = @transform_2, window_bounds = array<i64: 1, 8, 128>}]} {
    %c1_i32 = arith.constant 1 : i32
    %0 = arith.cmpi slt, %arg0, %c1_i32 : i32
    %c1_i32_0 = arith.constant 1 : i32
    %1 = arith.subi %arg0, %c1_i32_0 : i32
    %2 = arith.select %0, %arg0, %1 : i32
    %c128_i32 = arith.constant 128 : i32
    %3 = arith.muli %2, %c128_i32 : i32
    %4 = tpu.assume_multiple %3, 128 : i32
    %c0 = arith.constant 0 : index
    %c0_1 = arith.constant 0 : index
    %5 = vector.load %arg1[%c0, %c0_1] : memref<128x128xf32, #tpu.memory_space<vmem>>, vector<128x128xf32>
    %c0_2 = arith.constant 0 : index
    %c0_3 = arith.constant 0 : index
    %6 = vector.load %arg2[%c0_2, %c0_3] : memref<128x128xf32, #tpu.memory_space<vmem>>, vector<128x128xf32>
    %7 = arith.index_cast %4 : i32 to index
    %c0_4 = arith.constant 0 : index
    %8 = vector.load %arg1[%7, %c0_4] : memref<128x128xf32, #tpu.memory_space<vmem>>, vector<128x128xf32>
    %9 = arith.index_cast %4 : i32 to index
    %c0_5 = arith.constant 0 : index
    %10 = vector.load %arg2[%9, %c0_5] : memref<128x128xf32, #tpu.memory_space<vmem>>, vector<128x128xf32>
    %11 = arith.select %0, %8, %10 : vector<128x128xf32>
    %cst = arith.constant dense<0.000000e+00> : vector<128x128xf32>
    %12 = tpu.matmul %11, %5, %cst {dimension_numbers = #tpu.dot_dimension_numbers<[1], [1], [0], [0], [0, 0, 1, 0], [], []>} : vector<128x128xf32>, vector<128x128xf32>, vector<128x128xf32> -> vector<128x128xf32>
    %cst_6 = arith.constant dense<0.000000e+00> : vector<128x128xf32>
    %13 = tpu.matmul %11, %6, %cst_6 {dimension_numbers = #tpu.dot_dimension_numbers<[1], [1], [0], [0], [0, 0, 1, 0], [], []>} : vector<128x128xf32>, vector<128x128xf32>, vector<128x128xf32> -> vector<128x128xf32>
    %14 = arith.select %0, %13, %12 : vector<128x128xf32>
    %15 = arith.select %0, %12, %13 : vector<128x128xf32>
    %16 = tpu.iota {dimensions = array<i32: 0>} : vector<128x1xi32>
    %17 = vector.broadcast %4 : i32 to vector<128x1xi32>
    %18 = arith.addi %17, %16 : vector<128x1xi32>
    %19 = tpu.iota {dimensions = array<i32: 1>} : vector<1x128xi32>
    %c8_i32 = arith.constant 8 : i32
    %20 = vector.broadcast %c8_i32 : i32 to vector<128x1xi32>
    %21 = arith.cmpi slt, %18, %20 : vector<128x1xi32>
    %c8_i32_7 = arith.constant 8 : i32
    %22 = vector.broadcast %c8_i32_7 : i32 to vector<1x128xi32>
    %23 = arith.cmpi slt, %19, %22 : vector<1x128xi32>
    %24 = arith.mulf %8, %10 : vector<128x128xf32>
    %cst_8 = arith.constant dense<0.000000e+00> : vector<128xf32>
    %25 = vector.multi_reduction <add>, %24, %cst_8 [1] : vector<128x128xf32> to vector<128xf32>
    %26 = vector.shape_cast %25 : vector<128xf32> to vector<128x1xf32>
    %cst_9 = arith.constant -1.000000e+30 : f32
    %27 = vector.shape_cast %23 : vector<1x128xi1> to vector<1x128xi1>
    %28 = vector.broadcast %27 : vector<1x128xi1> to vector<128x128xi1>
    %29 = vector.broadcast %cst_9 : f32 to vector<128x128xf32>
    %30 = arith.select %28, %14, %29 : vector<128x128xi1>, vector<128x128xf32>
    %cst_10 = arith.constant dense<0xFF800000> : vector<128xf32>
    %31 = vector.multi_reduction <maximumf>, %30, %cst_10 [1] : vector<128x128xf32> to vector<128xf32>
    %32 = vector.shape_cast %31 : vector<128xf32> to vector<128x1xf32>
    %33 = vector.broadcast %32 : vector<128x1xf32> to vector<128x128xf32>
    %34 = arith.subf %30, %33 : vector<128x128xf32>
    %35 = math.exp %34 : vector<128x128xf32>
    %cst_11 = arith.constant dense<0.000000e+00> : vector<128xf32>
    %36 = vector.multi_reduction <add>, %35, %cst_11 [1] : vector<128x128xf32> to vector<128xf32>
    %37 = vector.shape_cast %36 : vector<128xf32> to vector<128x1xf32>
    %38 = math.log %37 : vector<128x1xf32>
    %39 = arith.addf %32, %38 : vector<128x1xf32>
    %40 = arith.subf %39, %26 : vector<128x1xf32>
    %cst_12 = arith.constant 0.000000e+00 : f32
    %41 = vector.broadcast %cst_12 : f32 to vector<128x1xf32>
    %42 = arith.select %21, %40, %41 : vector<128x1xi1>, vector<128x1xf32>
    %43 = vector.shape_cast %42 : vector<128x1xf32> to vector<1x128x1xf32>
    %cst_13 = arith.constant dense<0.000000e+00> : vector<1xf32>
    %44 = vector.multi_reduction <add>, %43, %cst_13 [1, 2] : vector<1x128x1xf32> to vector<1xf32>
    %45 = vector.shape_cast %44 : vector<1xf32> to vector<1x1x1xf32>
    %46 = vector.extract %45[0, 0, 0] : f32 from vector<1x1x1xf32>
    %47 = vector.broadcast %19 : vector<1x128xi32> to vector<128x128xi32>
    %48 = vector.broadcast %18 : vector<128x1xi32> to vector<128x128xi32>
    %49 = arith.cmpi eq, %47, %48 : vector<128x128xi32>
    %50 = vector.broadcast %19 : vector<1x128xi32> to vector<128x128xi32>
    %51 = vector.broadcast %18 : vector<128x1xi32> to vector<128x128xi32>
    %52 = arith.cmpi sge, %50, %51 : vector<128x128xi32>
    %53 = vector.broadcast %23 : vector<1x128xi1> to vector<128x128xi1>
    %54 = arith.andi %52, %53 : vector<128x128xi1>
    %55 = arith.extui %54 : vector<128x128xi1> to vector<128x128xi32>
    %56 = arith.sitofp %55 : vector<128x128xi32> to vector<128x128xf32>
    %57 = math.absf %15 : vector<128x128xf32>
    %cst_14 = arith.constant 0.000000e+00 : f32
    %58 = vector.broadcast %cst_14 : f32 to vector<128x128xf32>
    %59 = arith.subf %58, %57 : vector<128x128xf32>
    %60 = math.exp %59 : vector<128x128xf32>
    %cst_15 = arith.constant 1.000000e+00 : f32
    %61 = vector.broadcast %cst_15 : f32 to vector<128x128xf32>
    %62 = arith.addf %61, %60 : vector<128x128xf32>
    %63 = tpu.reciprocal %62 {approx = true} : vector<128x128xf32> -> vector<128x128xf32>
    %cst_16 = arith.constant 0.000000e+00 : f32
    %64 = vector.broadcast %cst_16 : f32 to vector<128x128xf32>
    %65 = arith.cmpf oge, %15, %64 : vector<128x128xf32>
    %66 = arith.mulf %60, %63 : vector<128x128xf32>
    %67 = arith.select %65, %63, %66 : vector<128x128xi1>, vector<128x128xf32>
    %cst_17 = arith.constant 1.000000e+00 : f32
    %68 = vector.broadcast %cst_17 : f32 to vector<128x128xf32>
    %69 = arith.select %49, %68, %67 : vector<128x128xi1>, vector<128x128xf32>
    %70 = math.absf %14 : vector<128x128xf32>
    %cst_18 = arith.constant 0.000000e+00 : f32
    %71 = vector.broadcast %cst_18 : f32 to vector<128x128xf32>
    %72 = arith.subf %71, %70 : vector<128x128xf32>
    %73 = math.exp %72 : vector<128x128xf32>
    %cst_19 = arith.constant 1.000000e+00 : f32
    %74 = vector.broadcast %cst_19 : f32 to vector<128x128xf32>
    %75 = arith.addf %74, %73 : vector<128x128xf32>
    %76 = tpu.reciprocal %75 {approx = true} : vector<128x128xf32> -> vector<128x128xf32>
    %cst_20 = arith.constant 0.000000e+00 : f32
    %77 = vector.broadcast %cst_20 : f32 to vector<128x128xf32>
    %78 = arith.cmpf oge, %14, %77 : vector<128x128xf32>
    %79 = arith.mulf %73, %76 : vector<128x128xf32>
    %80 = arith.select %78, %76, %79 : vector<128x128xi1>, vector<128x128xf32>
    %cst_21 = arith.constant 1.000000e+00 : f32
    %81 = vector.broadcast %cst_21 : f32 to vector<128x128xf32>
    %82 = arith.subf %81, %56 : vector<128x128xf32>
    %83 = arith.mulf %69, %82 : vector<128x128xf32>
    %cst_22 = arith.constant 0.000000e+00 : f32
    %84 = vector.broadcast %cst_22 : f32 to vector<128x128xf32>
    %85 = arith.subf %84, %69 : vector<128x128xf32>
    %86 = math.exp %85 : vector<128x128xf32>
    %cst_23 = arith.constant 1.000000e+00 : f32
    %87 = vector.broadcast %cst_23 : f32 to vector<128x128xf32>
    %88 = arith.addf %87, %86 : vector<128x128xf32>
    %89 = math.log %88 : vector<128x128xf32>
    %90 = arith.addf %83, %89 : vector<128x128xf32>
    %cst_24 = arith.constant 0.000000e+00 : f32
    %91 = vector.broadcast %cst_24 : f32 to vector<128x128xf32>
    %92 = arith.subf %91, %80 : vector<128x128xf32>
    %93 = math.exp %92 : vector<128x128xf32>
    %cst_25 = arith.constant 1.000000e+00 : f32
    %94 = vector.broadcast %cst_25 : f32 to vector<128x128xf32>
    %95 = arith.addf %94, %93 : vector<128x128xf32>
    %96 = math.log %95 : vector<128x128xf32>
    %97 = arith.addf %80, %96 : vector<128x128xf32>
    %cst_26 = arith.constant 0.000000e+00 : f32
    %98 = vector.shape_cast %23 : vector<1x128xi1> to vector<1x128xi1>
    %99 = vector.broadcast %98 : vector<1x128xi1> to vector<128x128xi1>
    %100 = vector.broadcast %cst_26 : f32 to vector<128x128xf32>
    %101 = arith.select %99, %90, %100 : vector<128x128xi1>, vector<128x128xf32>
    %cst_27 = arith.constant 0.000000e+00 : f32
    %102 = vector.shape_cast %23 : vector<1x128xi1> to vector<1x128xi1>
    %103 = vector.broadcast %102 : vector<1x128xi1> to vector<128x128xi1>
    %104 = vector.broadcast %cst_27 : f32 to vector<128x128xf32>
    %105 = arith.select %103, %97, %104 : vector<128x128xi1>, vector<128x128xf32>
    %106 = arith.mulf %101, %56 : vector<128x128xf32>
    %cst_28 = arith.constant dense<0.000000e+00> : vector<128xf32>
    %107 = vector.multi_reduction <add>, %106, %cst_28 [1] : vector<128x128xf32> to vector<128xf32>
    %108 = vector.shape_cast %107 : vector<128xf32> to vector<128x1xf32>
    %cst_29 = arith.constant dense<0.000000e+00> : vector<128xf32>
    %109 = vector.multi_reduction <add>, %101, %cst_29 [1] : vector<128x128xf32> to vector<128xf32>
    %110 = vector.shape_cast %109 : vector<128xf32> to vector<128x1xf32>
    %cst_30 = arith.constant dense<0.000000e+00> : vector<128xf32>
    %111 = vector.multi_reduction <add>, %105, %cst_30 [1] : vector<128x128xf32> to vector<128xf32>
    %112 = vector.shape_cast %111 : vector<128xf32> to vector<128x1xf32>
    %113 = arith.addf %110, %112 : vector<128x1xf32>
    %114 = arith.subf %113, %108 : vector<128x1xf32>
    %c8_i32_31 = arith.constant 8 : i32
    %115 = vector.broadcast %c8_i32_31 : i32 to vector<128x1xi32>
    %116 = arith.subi %115, %18 : vector<128x1xi32>
    %117 = arith.sitofp %116 : vector<128x1xi32> to vector<128x1xf32>
    %cst_32 = arith.constant 1.000000e+00 : f32
    %118 = vector.broadcast %cst_32 : f32 to vector<128x1xf32>
    %119 = arith.maximumf %117, %118 : vector<128x1xf32>
    %cst_33 = arith.constant 1.600000e+01 : f32
    %120 = vector.broadcast %cst_33 : f32 to vector<128x1xf32>
    %121 = arith.subf %120, %119 : vector<128x1xf32>
    %cst_34 = arith.constant 1.000000e+00 : f32
    %122 = vector.broadcast %cst_34 : f32 to vector<128x1xf32>
    %123 = arith.maximumf %121, %122 : vector<128x1xf32>
    %124 = tpu.reciprocal %119 {approx = true} : vector<128x1xf32> -> vector<128x1xf32>
    %125 = arith.mulf %108, %124 : vector<128x1xf32>
    %126 = tpu.reciprocal %123 {approx = true} : vector<128x1xf32> -> vector<128x1xf32>
    %127 = arith.mulf %114, %126 : vector<128x1xf32>
    %128 = arith.addf %125, %127 : vector<128x1xf32>
    %cst_35 = arith.constant 0.000000e+00 : f32
    %129 = vector.broadcast %cst_35 : f32 to vector<128x1xf32>
    %130 = arith.select %21, %128, %129 : vector<128x1xi1>, vector<128x1xf32>
    %131 = vector.shape_cast %130 : vector<128x1xf32> to vector<1x128x1xf32>
    %cst_36 = arith.constant dense<0.000000e+00> : vector<1xf32>
    %132 = vector.multi_reduction <add>, %131, %cst_36 [1, 2] : vector<1x128x1xf32> to vector<1xf32>
    %133 = vector.shape_cast %132 : vector<1xf32> to vector<1x1x1xf32>
    %134 = vector.extract %133[0, 0, 0] : f32 from vector<1x1x1xf32>
    %135 = tpu.iota {dimensions = array<i32: 0>} : vector<8x128xi32>
    %136 = tpu.iota {dimensions = array<i32: 1>} : vector<8x128xi32>
    %c0_i32 = arith.constant 0 : i32
    %137 = vector.broadcast %c0_i32 : i32 to vector<8x128xi32>
    %138 = arith.cmpi eq, %135, %137 : vector<8x128xi32>
    %c0_i32_37 = arith.constant 0 : i32
    %139 = vector.broadcast %c0_i32_37 : i32 to vector<8x128xi32>
    %140 = arith.cmpi eq, %136, %139 : vector<8x128xi32>
    %141 = arith.andi %138, %140 : vector<8x128xi1>
    %cst_38 = arith.constant 0.000000e+00 : f32
    %142 = vector.broadcast %46 : f32 to vector<8x128xf32>
    %143 = vector.broadcast %cst_38 : f32 to vector<8x128xf32>
    %144 = arith.select %141, %142, %143 : vector<8x128xi1>, vector<8x128xf32>
    %c0_i32_39 = arith.constant 0 : i32
    %145 = vector.broadcast %c0_i32_39 : i32 to vector<8x128xi32>
    %146 = arith.cmpi eq, %135, %145 : vector<8x128xi32>
    %c1_i32_40 = arith.constant 1 : i32
    %147 = vector.broadcast %c1_i32_40 : i32 to vector<8x128xi32>
    %148 = arith.cmpi eq, %136, %147 : vector<8x128xi32>
    %149 = arith.andi %146, %148 : vector<8x128xi1>
    %cst_41 = arith.constant 0.000000e+00 : f32
    %150 = vector.broadcast %134 : f32 to vector<8x128xf32>
    %151 = vector.broadcast %cst_41 : f32 to vector<8x128xf32>
    %152 = arith.select %149, %150, %151 : vector<8x128xi1>, vector<8x128xf32>
    %153 = arith.addf %144, %152 : vector<8x128xf32>
    %154 = vector.shape_cast %153 : vector<8x128xf32> to vector<1x8x128xf32>
    %c0_42 = arith.constant 0 : index
    %c0_43 = arith.constant 0 : index
    %c0_44 = arith.constant 0 : index
    %155 = vector.load %arg3[%c0_42, %c0_43, %c0_44] : memref<1x8x128xf32, #tpu.memory_space<vmem>>, vector<1x8x128xf32>
    tpu.vector_store %arg3[%c0_42, %c0_43, %c0_44], %154 {strides = array<i32>} : memref<1x8x128xf32, #tpu.memory_space<vmem>>, vector<1x8x128xf32>,
    return
  }
  func.func @transform_0(%arg0: i32) -> (i32, i32) {
    %c0_i32 = arith.constant 0 : i32
    %c0_i32_0 = arith.constant 0 : i32
    %c0_i32_1 = arith.constant 0 : i32
    return %c0_i32, %c0_i32_0 : i32, i32
  }
  func.func @transform_1(%arg0: i32) -> (i32, i32) {
    %c0_i32 = arith.constant 0 : i32
    %c0_i32_0 = arith.constant 0 : i32
    %c0_i32_1 = arith.constant 0 : i32
    return %c0_i32, %c0_i32_0 : i32, i32
  }
  func.func @transform_2(%arg0: i32) -> (i32, i32, i32) {
    %c0_i32 = arith.constant 0 : i32
    %c0_i32_0 = arith.constant 0 : i32
    %c0_i32_1 = arith.constant 0 : i32
    return %arg0, %c0_i32, %c0_i32_0 : i32, i32, i32
  }
}

</mosaic_0001>

<llo_original>
// kernel: tpu_custom_call.1
$region0: #{tpu_custom_call.1}
  #allocation0 [shape = 'u32[]', space=smem, size = 0x4, offset = 0x4, fixed_abs, tag = 'smem constant byte address 0x4 - core index']
  #allocation1 [shape = 'u32[144,128]{1,0:T(1,128)}', space=vmem, size = 0x12000, scoped, tag = 'internal scratch']
  %s0 = inlined_call_operand.hbm [shape: f32[128,128], index: 0, kind: input, shape index: {}]
  %s1 = inlined_call_operand.hbm [shape: f32[128,128], index: 1, kind: input, shape index: {}]
  %s2 = inlined_call_operand.hbm [shape: f32[2,8,128], index: 2, kind: output, shape index: {}]
  %s3 = sld [smem:[#allocation0]]
  $region49: #{tpu_custom_call.1} parent=0
    _
  %s5 = ssub.s32 1, %s3
  %s6 = scalar_select 0, %s5, %s3
  $region1: #{tpu_custom_call.1} parent=0
    #allocation2 [shape = 'u8[65536]{0}', space=vmem, size = 0x10000, scoped, tag = 'input window, operand 0, single buffered']
    #allocation3 [shape = 's32[2]{0}', space=sflag, size = 0x8, scoped, tag = 'scoped memory for tpu_custom_call.1']
    #allocation4 [shape = 's32[2]{0}', space=sflag, size = 0x8, scoped, tag = 'scoped memory for tpu_custom_call.1']
    #allocation5 [shape = 'u8[65536]{0}', space=vmem, size = 0x10000, scoped, tag = 'input window, operand 1, single buffered']
    #allocation6 [shape = 's32[1]{0}', space=sflag, size = 0x4, scoped, tag = 'scoped memory for tpu_custom_call.1']
    #allocation7 [shape = 'u8[8192]{0}', space=vmem, size = 0x2000, scoped, tag = 'output window, operand 0']
    %7 = vsyncpa [#allocation3], 0
    %8 = vsyncpa [#allocation6], 0
    %9 = vsyncpa [#allocation4], 0
    %s10 = scalar_lea.sflag [#allocation4], 1
    %11 = vsyncpa %s10, 0
    loop: start=0, step=1, limit=4
    $region2: #{tpu_custom_call.1} parent=1 // loop_pre_header
      _
    $region3: #{tpu_custom_call.1} parent=1 // loop_header
      %s13 = sphi 0, %s17
      %p14 = scmp.ge.s32.totalorder %s13, 4
      %s21 = sphi 0, %s21
      %s23 = sphi 0, %s21
      %s24 = sphi 0, %s23
      %s38 = sphi 0, %s24
      %s42 = sphi 0, %s42
      %s44 = sphi 0, %s42
      %s45 = sphi 0, %s44
      %s59 = sphi 0, %s45
      %s65 = sphi 0, %s67
      %s68 = sphi 0, %s65
      %s69 = sphi 0, %s68
      %s85 = sphi 0, %s69
    $region4: #{tpu_custom_call.1} parent=1 // loop_header_branch
      %16 = sbr.rel (%p14) target = $region8
    $region5: #{tpu_custom_call.1} parent=1 // loop_body
      %s18 = ssub.s32 %s13, 1
      %s19 = ssub.s32 %s13, 2
      %s20 = sadd.s32 %s13, 1
      %s22 = sadd.s32 %s21, 1
      %p25 = scmp.eq.s32.totalorder %s13, 1
      %p26 = scmp.ne.s32.totalorder %s21, %s23
      %p27 = scmp.eq.s32.totalorder %s13, 0
      %p28 = por %p26, %p27
      %p29 = scmp.ne.s32.totalorder %s21, %s23
      %p30 = scmp.eq.s32.totalorder %s18, 1
      %p31 = por %p29, %p30
      %p32 = scmp.ne.s32.totalorder %s23, %s24
      %p33 = scmp.eq.s32.totalorder %s18, 0
      %p34 = por %p32, %p33
      %p35 = scmp.ne.s32.totalorder %s23, %s24
      %p36 = scmp.eq.s32.totalorder %s19, 1
      %p37 = por %p35, %p36
      %p39 = scmp.ne.s32.totalorder %s24, %s38
      %p40 = scmp.eq.s32.totalorder %s19, 0
      %p41 = por %p39, %p40
      %s43 = sadd.s32 %s42, 1
      %p46 = scmp.eq.s32.totalorder %s13, 1
      %p47 = scmp.ne.s32.totalorder %s42, %s44
      %p48 = scmp.eq.s32.totalorder %s13, 0
      %p49 = por %p47, %p48
      %p50 = scmp.ne.s32.totalorder %s42, %s44
      %p51 = scmp.eq.s32.totalorder %s18, 1
      %p52 = por %p50, %p51
      %p53 = scmp.ne.s32.totalorder %s44, %s45
      %p54 = scmp.eq.s32.totalorder %s18, 0
      %p55 = por %p53, %p54
      %p56 = scmp.ne.s32.totalorder %s44, %s45
      %p57 = scmp.eq.s32.totalorder %s19, 1
      %p58 = por %p56, %p57
      %p60 = scmp.ne.s32.totalorder %s45, %s59
      %p61 = scmp.eq.s32.totalorder %s19, 0
      %p62 = por %p60, %p61
      %s63 = ssub.s32 %s13, %s20
      %p64 = scmp.eq.s32.totalorder %s63, 0
      %s66 = sadd.s32 %s65, 1
      %s67 = scalar_select %p64, %s65, %s66
      %p70 = pneg %p64
      %p71 = scmp.eq.s32.totalorder %s13, 1
      %p72 = por %p70, %p71
      %p73 = scmp.ne.s32.totalorder %s65, %s68
      %p74 = scmp.eq.s32.totalorder %s13, 0
      %p75 = por %p73, %p74
      %p76 = scmp.ne.s32.totalorder %s65, %s68
      %p77 = scmp.eq.s32.totalorder %s18, 1
      %p78 = por %p76, %p77
      %p79 = scmp.ne.s32.totalorder %s68, %s69
      %p80 = scmp.eq.s32.totalorder %s18, 0
      %p81 = por %p79, %p80
      %p82 = scmp.ne.s32.totalorder %s68, %s69
      %p83 = scmp.eq.s32.totalorder %s19, 1
      %p84 = por %p82, %p83
      %p86 = scmp.ne.s32.totalorder %s69, %s85
      %p87 = scmp.eq.s32.totalorder %s19, 0
      %p88 = por %p86, %p87
      %p89 = scmp.le.s32.totalorder 1, %s13
      %p90 = scmp.lt.s32.totalorder %s13, 3
      %p91 = pnand %p89, %p90
      %p92 = pneg %p91
      // Predicated region
      $region9: #{tpu_custom_call.1} parent=5 // pred_check
        _
      $region10: #{tpu_custom_call.1} parent=5 // pred_check_branch
        %94 = sbr.rel (%p91) target = $region12
      $region11: #{tpu_custom_call.1} parent=5 // pred_region
        %s95 = ssub.s32 %s13, 1
        // Predicated region
        $region13: #{tpu_custom_call.1} parent=11 // pred_check
          %p96 = pneg %p34
        $region14: #{tpu_custom_call.1} parent=11 // pred_check_branch
          %98 = sbr.rel (%p96) target = $region16
        $region15: #{tpu_custom_call.1} parent=11 // pred_region
          %s100 = ssub.s32 2048, 2048
          %101 = vsyncadd [#allocation3], %s100
          %s102 = sshll.u32 [#allocation2], 4
          %s103 = int_to_ptr.vmem [resolvable:$true] %s102
          %108 = dma.hbm_to_vmem [thread:$0]  %s0, 2048, %s103, [#allocation3], 128, 128, 8
        $region16: #{tpu_custom_call.1} parent=11 // pred_fallthru
          _
        // Predicated region
        $region17: #{tpu_custom_call.1} parent=11 // pred_check
          %p109 = pneg %p55
        $region18: #{tpu_custom_call.1} parent=11 // pred_check_branch
          %111 = sbr.rel (%p109) target = $region20
        $region19: #{tpu_custom_call.1} parent=11 // pred_region
          %s113 = ssub.s32 2048, 2048
          %114 = vsyncadd [#allocation6], %s113
          %s115 = sshll.u32 [#allocation5], 4
          %s116 = int_to_ptr.vmem [resolvable:$true] %s115
          %121 = dma.hbm_to_vmem [thread:$0]  %s1, 2048, %s116, [#allocation6], 128, 128, 8
        $region20: #{tpu_custom_call.1} parent=11 // pred_fallthru
          _
      $region12: #{tpu_custom_call.1} parent=5 // pred_fallthru
        _
      %p122 = scmp.lt.s32.totalorder %s13, 2
      // Predicated region
      $region21: #{tpu_custom_call.1} parent=5 // pred_check
        %p123 = pneg %p122
      $region22: #{tpu_custom_call.1} parent=5 // pred_check_branch
        %125 = sbr.rel (%p123) target = $region24
      $region23: #{tpu_custom_call.1} parent=5 // pred_region
        _
      $region24: #{tpu_custom_call.1} parent=5 // pred_fallthru
        _
      %p126 = scmp.le.s32.totalorder 1, %s13
      %p127 = scmp.lt.s32.totalorder %s13, 3
      %p128 = pnand %p126, %p127
      %p129 = pneg %p128
      // Predicated region
      $region25: #{tpu_custom_call.1} parent=5 // pred_check
        _
      $region26: #{tpu_custom_call.1} parent=5 // pred_check_branch
        %131 = sbr.rel (%p128) target = $region28
      $region27: #{tpu_custom_call.1} parent=5 // pred_region
        %s132 = ssub.s32 %s13, 1
        // Predicated region
        $region29: #{tpu_custom_call.1} parent=27 // pred_check
          %p133 = pneg %p34
        $region30: #{tpu_custom_call.1} parent=27 // pred_check_branch
          %135 = sbr.rel (%p133) target = $region32
        $region31: #{tpu_custom_call.1} parent=27 // pred_region
          %136 = dma.done [#allocation3], 2048
        $region32: #{tpu_custom_call.1} parent=27 // pred_fallthru
          _
        // Predicated region
        $region33: #{tpu_custom_call.1} parent=27 // pred_check
          %p137 = pneg %p55
        $region34: #{tpu_custom_call.1} parent=27 // pred_check_branch
          %139 = sbr.rel (%p137) target = $region36
        $region35: #{tpu_custom_call.1} parent=27 // pred_region
          %140 = dma.done [#allocation6], 2048
        $region36: #{tpu_custom_call.1} parent=27 // pred_fallthru
          _
        %p141 = pneg %p34
        %p142 = pneg %p31
        %p143 = pneg %p55
        %p144 = pneg %p52
        %p145 = pneg %p81
        %p146 = pneg %p78
        %s147 = sand.u32 %s68, 1
        %s148 = scalar_lea.sflag [#allocation4], %s147
        %s149 = sand.u32 %s68, 1
        %s150 = smul.addr %s149, 8
        %s151 = scalar_lea.vmem [#allocation7], %s150
        %p152 = scmp.lt.s32.totalorder %s18, 1
        %s153 = ssub.s32 %s18, 1
        %s154 = scalar_select %p152, %s18, %s153
        %s155 = smul.u32 %s154, 128
        %v156 = vld [vmem:[#allocation2] sm:$0xff]
        %v157 = vld [vmem:[#allocation2 + $0x8] sm:$0xff]
        %v158 = vld [vmem:[#allocation2 + $0x10] sm:$0xff]
        %v159 = vld [vmem:[#allocation2 + $0x18] sm:$0xff]
        %v160 = vld [vmem:[#allocation2 + $0x20] sm:$0xff]
        %v161 = vld [vmem:[#allocation2 + $0x28] sm:$0xff]
        %v162 = vld [vmem:[#allocation2 + $0x30] sm:$0xff]
        %v163 = vld [vmem:[#allocation2 + $0x38] sm:$0xff]
        %v164 = vld [vmem:[#allocation2 + $0x40] sm:$0xff]
        %v165 = vld [vmem:[#allocation2 + $0x48] sm:$0xff]
        %v166 = vld [vmem:[#allocation2 + $0x50] sm:$0xff]
        %v167 = vld [vmem:[#allocation2 + $0x58] sm:$0xff]
        %v168 = vld [vmem:[#allocation2 + $0x60] sm:$0xff]
        %v169 = vld [vmem:[#allocation2 + $0x68] sm:$0xff]
        %v170 = vld [vmem:[#allocation2 + $0x70] sm:$0xff]
        %v171 = vld [vmem:[#allocation2 + $0x78] sm:$0xff]
        %v172 = vld [vmem:[#allocation5] sm:$0xff]
        %v173 = vld [vmem:[#allocation5 + $0x8] sm:$0xff]
        %v174 = vld [vmem:[#allocation5 + $0x10] sm:$0xff]
        %v175 = vld [vmem:[#allocation5 + $0x18] sm:$0xff]
        %v176 = vld [vmem:[#allocation5 + $0x20] sm:$0xff]
        %v177 = vld [vmem:[#allocation5 + $0x28] sm:$0xff]
        %v178 = vld [vmem:[#allocation5 + $0x30] sm:$0xff]
        %v179 = vld [vmem:[#allocation5 + $0x38] sm:$0xff]
        %v180 = vld [vmem:[#allocation5 + $0x40] sm:$0xff]
        %v181 = vld [vmem:[#allocation5 + $0x48] sm:$0xff]
        %v182 = vld [vmem:[#allocation5 + $0x50] sm:$0xff]
        %v183 = vld [vmem:[#allocation5 + $0x58] sm:$0xff]
        %v184 = vld [vmem:[#allocation5 + $0x60] sm:$0xff]
        %v185 = vld [vmem:[#allocation5 + $0x68] sm:$0xff]
        %v186 = vld [vmem:[#allocation5 + $0x70] sm:$0xff]
        %v187 = vld [vmem:[#allocation5 + $0x78] sm:$0xff]
        %s188 = scalar_lea.vmem [#allocation2], %s155
        %v189 = vld [vmem:[%s188] sm:$0xff]
        %v190 = vld [vmem:[%s188 + $0x8] sm:$0xff]
        %v191 = vld [vmem:[%s188 + $0x10] sm:$0xff]
        %v192 = vld [vmem:[%s188 + $0x18] sm:$0xff]
        %v193 = vld [vmem:[%s188 + $0x20] sm:$0xff]
        %v194 = vld [vmem:[%s188 + $0x28] sm:$0xff]
        %v195 = vld [vmem:[%s188 + $0x30] sm:$0xff]
        %v196 = vld [vmem:[%s188 + $0x38] sm:$0xff]
        %v197 = vld [vmem:[%s188 + $0x40] sm:$0xff]
        %v198 = vld [vmem:[%s188 + $0x48] sm:$0xff]
        %v199 = vld [vmem:[%s188 + $0x50] sm:$0xff]
        %v200 = vld [vmem:[%s188 + $0x58] sm:$0xff]
        %v201 = vld [vmem:[%s188 + $0x60] sm:$0xff]
        %v202 = vld [vmem:[%s188 + $0x68] sm:$0xff]
        %v203 = vld [vmem:[%s188 + $0x70] sm:$0xff]
        %v204 = vld [vmem:[%s188 + $0x78] sm:$0xff]
        %s205 = scalar_lea.vmem [#allocation5], %s155
        %v206 = vld [vmem:[%s205] sm:$0xff]
        %v207 = vld [vmem:[%s205 + $0x8] sm:$0xff]
        %v208 = vld [vmem:[%s205 + $0x10] sm:$0xff]
        %v209 = vld [vmem:[%s205 + $0x18] sm:$0xff]
        %v210 = vld [vmem:[%s205 + $0x20] sm:$0xff]
        %v211 = vld [vmem:[%s205 + $0x28] sm:$0xff]
        %v212 = vld [vmem:[%s205 + $0x30] sm:$0xff]
        %v213 = vld [vmem:[%s205 + $0x38] sm:$0xff]
        %v214 = vld [vmem:[%s205 + $0x40] sm:$0xff]
        %v215 = vld [vmem:[%s205 + $0x48] sm:$0xff]
        %v216 = vld [vmem:[%s205 + $0x50] sm:$0xff]
        %v217 = vld [vmem:[%s205 + $0x58] sm:$0xff]
        %v218 = vld [vmem:[%s205 + $0x60] sm:$0xff]
        %v219 = vld [vmem:[%s205 + $0x68] sm:$0xff]
        %v220 = vld [vmem:[%s205 + $0x70] sm:$0xff]
        %v221 = vld [vmem:[%s205 + $0x78] sm:$0xff]
        %s222 = scalar_select %p152, 1, 0
        %v223 = vstv %s222
        %vm224 = vcmp.eq.s32.totalorder %v223, 1
        %v225 = vsel %vm224, %v189, %v206
        %v226 = vsel %vm224, %v190, %v207
        %v227 = vsel %vm224, %v191, %v208
        %v228 = vsel %vm224, %v192, %v209
        %v229 = vsel %vm224, %v193, %v210
        %v230 = vsel %vm224, %v194, %v211
        %v231 = vsel %vm224, %v195, %v212
        %v232 = vsel %vm224, %v196, %v213
        %v233 = vsel %vm224, %v197, %v214
        %v234 = vsel %vm224, %v198, %v215
        %v235 = vsel %vm224, %v199, %v216
        %v236 = vsel %vm224, %v200, %v217
        %v237 = vsel %vm224, %v201, %v218
        %v238 = vsel %vm224, %v202, %v219
        %v239 = vsel %vm224, %v203, %v220
        %v240 = vsel %vm224, %v204, %v221
        %241 = vmatprep.subr.mxu0 0.0
        %242 = vmatpush1.xpose.msra.mxu0 %v156
        %243 = vmatprep.subr.mxu0 0.0
        %244 = vmatpush1.xpose.msra.mxu0 %v157
        %245 = vmatprep.subr.mxu0 0.0
        %246 = vmatpush1.xpose.msra.mxu0 %v158
        %247 = vmatprep.subr.mxu0 0.0
        %248 = vmatpush1.xpose.msra.mxu0 %v159
        %249 = vmatprep.subr.mxu0 0.0
        %250 = vmatpush1.xpose.msra.mxu0 %v160
        %251 = vmatprep.subr.mxu0 0.0
        %252 = vmatpush1.xpose.msra.mxu0 %v161
        %253 = vmatprep.subr.mxu0 0.0
        %254 = vmatpush1.xpose.msra.mxu0 %v162
        %255 = vmatprep.subr.mxu0 0.0
        %256 = vmatpush1.xpose.msra.mxu0 %v163
        %257 = vmatprep.subr.mxu0 0.0
        %258 = vmatpush1.xpose.msra.mxu0 %v164
        %259 = vmatprep.subr.mxu0 0.0
        %260 = vmatpush1.xpose.msra.mxu0 %v165
        %261 = vmatprep.subr.mxu0 0.0
        %262 = vmatpush1.xpose.msra.mxu0 %v166
        %263 = vmatprep.subr.mxu0 0.0
        %264 = vmatpush1.xpose.msra.mxu0 %v167
        %265 = vmatprep.subr.mxu0 0.0
        %266 = vmatpush1.xpose.msra.mxu0 %v168
        %267 = vmatprep.subr.mxu0 0.0
        %268 = vmatpush1.xpose.msra.mxu0 %v169
        %269 = vmatprep.subr.mxu0 0.0
        %270 = vmatpush1.xpose.msra.mxu0 %v170
        %271 = vmatprep.subr.mxu0 0.0
        %272 = vmatpush1.xpose.msra.mxu0 %v171
        %273 = vmatprep.subr.mxu0 0.0
        %274 = vmatpush1.xpose.msra.mxu0 0.0
        %275 = vmatprep.subr.mxu0 0.0
        %276 = vmatpush1.xpose.msra.mxu0 0.0
        %277 = vmatprep.subr.mxu0 0.0
        %278 = vmatpush1.xpose.msra.mxu0 0.0
        %279 = vmatprep.subr.mxu0 0.0
        %280 = vmatpush1.xpose.msra.mxu0 0.0
        %281 = vmatprep.subr.mxu0 0.0
        %282 = vmatpush1.xpose.msra.mxu0 0.0
        %283 = vmatprep.subr.mxu0 0.0
        %284 = vmatpush1.xpose.msra.mxu0 0.0
        %285 = vmatprep.subr.mxu0 0.0
        %286 = vmatpush1.xpose.msra.mxu0 0.0
        %287 = vmatprep.subr.mxu0 0.0
        %288 = vmatpush1.xpose.msra.mxu0 0.0
        %289 = vmatprep.subr.mxu0 0.0
        %290 = vmatpush1.xpose.msra.mxu0 0.0
        %291 = vmatprep.subr.mxu0 0.0
        %292 = vmatpush1.xpose.msra.mxu0 0.0
        %293 = vmatprep.subr.mxu0 0.0
        %294 = vmatpush1.xpose.msra.mxu0 0.0
        %295 = vmatprep.subr.mxu0 0.0
        %296 = vmatpush1.xpose.msra.mxu0 0.0
        %297 = vmatprep.subr.mxu0 0.0
        %298 = vmatpush1.xpose.msra.mxu0 0.0
        %299 = vmatprep.subr.mxu0 0.0
        %300 = vmatpush1.xpose.msra.mxu0 0.0
        %301 = vmatprep.subr.mxu0 0.0
        %302 = vmatpush1.xpose.msra.mxu0 0.0
        %303 = vmatprep.subr.mxu0 0.0
        %304 = vmatpush1.xpose.msra.mxu0 0.0
        %305 = vmatprep.mubr.f32.mxu0 0.0
        %306 = vmatmul.mubr.f32.gmra.mrb[0].mxu0 %v225
        %v307 = vpop.f32.mrb[0].mxu0
        %v308 = vadd.f32 0.0, %v307
        %v309 = vpop.f32.mrb[0].mxu0
        %310 = vmatprep.mubr.f32.mxu0 0.0
        %311 = vmatmul.mubr.f32.gmra.mrb[0].mxu0 %v226
        %v312 = vpop.f32.mrb[0].mxu0
        %v313 = vadd.f32 0.0, %v312
        %v314 = vpop.f32.mrb[0].mxu0
        %315 = vmatprep.mubr.f32.mxu0 0.0
        %316 = vmatmul.mubr.f32.gmra.mrb[0].mxu0 %v227
        %v317 = vpop.f32.mrb[0].mxu0
        %v318 = vadd.f32 0.0, %v317
        %v319 = vpop.f32.mrb[0].mxu0
        %320 = vmatprep.mubr.f32.mxu0 0.0
        %321 = vmatmul.mubr.f32.gmra.mrb[0].mxu0 %v228
        %v322 = vpop.f32.mrb[0].mxu0
        %v323 = vadd.f32 0.0, %v322
        %v324 = vpop.f32.mrb[0].mxu0
        %325 = vmatprep.mubr.f32.mxu0 0.0
        %326 = vmatmul.mubr.f32.gmra.mrb[0].mxu0 %v229
        %v327 = vpop.f32.mrb[0].mxu0
        %v328 = vadd.f32 0.0, %v327
        %v329 = vpop.f32.mrb[0].mxu0
        %330 = vmatprep.mubr.f32.mxu0 0.0
        %331 = vmatmul.mubr.f32.gmra.mrb[0].mxu0 %v230
        %v332 = vpop.f32.mrb[0].mxu0
        %v333 = vadd.f32 0.0, %v332
        %v334 = vpop.f32.mrb[0].mxu0
        %335 = vmatprep.mubr.f32.mxu0 0.0
        %336 = vmatmul.mubr.f32.gmra.mrb[0].mxu0 %v231
        %v337 = vpop.f32.mrb[0].mxu0
        %v338 = vadd.f32 0.0, %v337
        %v339 = vpop.f32.mrb[0].mxu0
        %340 = vmatprep.mubr.f32.mxu0 0.0
        %341 = vmatmul.mubr.f32.gmra.mrb[0].mxu0 %v232
        %v342 = vpop.f32.mrb[0].mxu0
        %v343 = vadd.f32 0.0, %v342
        %v344 = vpop.f32.mrb[0].mxu0
        %345 = vmatprep.mubr.f32.mxu0 0.0
        %346 = vmatmul.mubr.f32.gmra.mrb[0].mxu0 %v233
        %v347 = vpop.f32.mrb[0].mxu0
        %v348 = vadd.f32 0.0, %v347
        %v349 = vpop.f32.mrb[0].mxu0
        %350 = vmatprep.mubr.f32.mxu0 0.0
        %351 = vmatmul.mubr.f32.gmra.mrb[0].mxu0 %v234
        %v352 = vpop.f32.mrb[0].mxu0
        %v353 = vadd.f32 0.0, %v352
        %v354 = vpop.f32.mrb[0].mxu0
        %355 = vmatprep.mubr.f32.mxu0 0.0
        %356 = vmatmul.mubr.f32.gmra.mrb[0].mxu0 %v235
        %v357 = vpop.f32.mrb[0].mxu0
        %v358 = vadd.f32 0.0, %v357
        %v359 = vpop.f32.mrb[0].mxu0
        %360 = vmatprep.mubr.f32.mxu0 0.0
        %361 = vmatmul.mubr.f32.gmra.mrb[0].mxu0 %v236
        %v362 = vpop.f32.mrb[0].mxu0
        %v363 = vadd.f32 0.0, %v362
        %v364 = vpop.f32.mrb[0].mxu0
        %365 = vmatprep.mubr.f32.mxu0 0.0
        %366 = vmatmul.mubr.f32.gmra.mrb[0].mxu0 %v237
        %v367 = vpop.f32.mrb[0].mxu0
        %v368 = vadd.f32 0.0, %v367
        %v369 = vpop.f32.mrb[0].mxu0
        %370 = vmatprep.mubr.f32.mxu0 0.0
        %371 = vmatmul.mubr.f32.gmra.mrb[0].mxu0 %v238
        %v372 = vpop.f32.mrb[0].mxu0
        %v373 = vadd.f32 0.0, %v372
        %v374 = vpop.f32.mrb[0].mxu0
        %375 = vmatprep.mubr.f32.mxu0 0.0
        %376 = vmatmul.mubr.f32.gmra.mrb[0].mxu0 %v239
        %v377 = vpop.f32.mrb[0].mxu0
        %v378 = vadd.f32 0.0, %v377
        %v379 = vpop.f32.mrb[0].mxu0
        %380 = vmatprep.mubr.f32.mxu0 0.0
        %381 = vmatmul.mubr.f32.gmra.mrb[0].mxu0 %v240
        %v382 = vpop.f32.mrb[0].mxu0
        %v383 = vadd.f32 0.0, %v382
        %v384 = vpop.f32.mrb[0].mxu0
        %385 = vdwg.mxu0
        %386 = vmatprep.subr.mxu0 0.0
        %387 = vmatpush1.xpose.msra.mxu0 %v172
        %388 = vmatprep.subr.mxu0 0.0
        %389 = vmatpush1.xpose.msra.mxu0 %v173
        %390 = vmatprep.subr.mxu0 0.0
        %391 = vmatpush1.xpose.msra.mxu0 %v174
        %392 = vmatprep.subr.mxu0 0.0
        %393 = vmatpush1.xpose.msra.mxu0 %v175
        %394 = vmatprep.subr.mxu0 0.0
        %395 = vmatpush1.xpose.msra.mxu0 %v176
        %396 = vmatprep.subr.mxu0 0.0
        %397 = vmatpush1.xpose.msra.mxu0 %v177
        %398 = vmatprep.subr.mxu0 0.0
        %399 = vmatpush1.xpose.msra.mxu0 %v178
        %400 = vmatprep.subr.mxu0 0.0
        %401 = vmatpush1.xpose.msra.mxu0 %v179
        %402 = vmatprep.subr.mxu0 0.0
        %403 = vmatpush1.xpose.msra.mxu0 %v180
        %404 = vmatprep.subr.mxu0 0.0
        %405 = vmatpush1.xpose.msra.mxu0 %v181
        %406 = vmatprep.subr.mxu0 0.0
        %407 = vmatpush1.xpose.msra.mxu0 %v182
        %408 = vmatprep.subr.mxu0 0.0
        %409 = vmatpush1.xpose.msra.mxu0 %v183
        %410 = vmatprep.subr.mxu0 0.0
        %411 = vmatpush1.xpose.msra.mxu0 %v184
        %412 = vmatprep.subr.mxu0 0.0
        %413 = vmatpush1.xpose.msra.mxu0 %v185
        %414 = vmatprep.subr.mxu0 0.0
        %415 = vmatpush1.xpose.msra.mxu0 %v186
        %416 = vmatprep.subr.mxu0 0.0
        %417 = vmatpush1.xpose.msra.mxu0 %v187
        %418 = vmatprep.subr.mxu0 0.0
        %419 = vmatpush1.xpose.msra.mxu0 0.0
        %420 = vmatprep.subr.mxu0 0.0
        %421 = vmatpush1.xpose.msra.mxu0 0.0
        %422 = vmatprep.subr.mxu0 0.0
        %423 = vmatpush1.xpose.msra.mxu0 0.0
        %424 = vmatprep.subr.mxu0 0.0
        %425 = vmatpush1.xpose.msra.mxu0 0.0
        %426 = vmatprep.subr.mxu0 0.0
        %427 = vmatpush1.xpose.msra.mxu0 0.0
        %428 = vmatprep.subr.mxu0 0.0
        %429 = vmatpush1.xpose.msra.mxu0 0.0
        %430 = vmatprep.subr.mxu0 0.0
        %431 = vmatpush1.xpose.msra.mxu0 0.0
        %432 = vmatprep.subr.mxu0 0.0
        %433 = vmatpush1.xpose.msra.mxu0 0.0
        %434 = vmatprep.subr.mxu0 0.0
        %435 = vmatpush1.xpose.msra.mxu0 0.0
        %436 = vmatprep.subr.mxu0 0.0
        %437 = vmatpush1.xpose.msra.mxu0 0.0
        %438 = vmatprep.subr.mxu0 0.0
        %439 = vmatpush1.xpose.msra.mxu0 0.0
        %440 = vmatprep.subr.mxu0 0.0
        %441 = vmatpush1.xpose.msra.mxu0 0.0
        %442 = vmatprep.subr.mxu0 0.0
        %443 = vmatpush1.xpose.msra.mxu0 0.0
        %444 = vmatprep.subr.mxu0 0.0
        %445 = vmatpush1.xpose.msra.mxu0 0.0
        %446 = vmatprep.subr.mxu0 0.0
        %447 = vmatpush1.xpose.msra.mxu0 0.0
        %448 = vmatprep.subr.mxu0 0.0
        %449 = vmatpush1.xpose.msra.mxu0 0.0
        %450 = vmatprep.mubr.f32.mxu0 0.0
        %451 = vmatmul.mubr.f32.gmra.mrb[0].mxu0 %v225
        %v452 = vpop.f32.mrb[0].mxu0
        %v453 = vadd.f32 0.0, %v452
        %v454 = vpop.f32.mrb[0].mxu0
        %455 = vmatprep.mubr.f32.mxu0 0.0
        %456 = vmatmul.mubr.f32.gmra.mrb[0].mxu0 %v226
        %v457 = vpop.f32.mrb[0].mxu0
        %v458 = vadd.f32 0.0, %v457
        %v459 = vpop.f32.mrb[0].mxu0
        %460 = vmatprep.mubr.f32.mxu0 0.0
        %461 = vmatmul.mubr.f32.gmra.mrb[0].mxu0 %v227
        %v462 = vpop.f32.mrb[0].mxu0
        %v463 = vadd.f32 0.0, %v462
        %v464 = vpop.f32.mrb[0].mxu0
        %465 = vmatprep.mubr.f32.mxu0 0.0
        %466 = vmatmul.mubr.f32.gmra.mrb[0].mxu0 %v228
        %v467 = vpop.f32.mrb[0].mxu0
        %v468 = vadd.f32 0.0, %v467
        %v469 = vpop.f32.mrb[0].mxu0
        %470 = vmatprep.mubr.f32.mxu0 0.0
        %471 = vmatmul.mubr.f32.gmra.mrb[0].mxu0 %v229
        %v472 = vpop.f32.mrb[0].mxu0
        %v473 = vadd.f32 0.0, %v472
        %v474 = vpop.f32.mrb[0].mxu0
        %475 = vmatprep.mubr.f32.mxu0 0.0
        %476 = vmatmul.mubr.f32.gmra.mrb[0].mxu0 %v230
        %v477 = vpop.f32.mrb[0].mxu0
        %v478 = vadd.f32 0.0, %v477
        %v479 = vpop.f32.mrb[0].mxu0
        %480 = vmatprep.mubr.f32.mxu0 0.0
        %481 = vmatmul.mubr.f32.gmra.mrb[0].mxu0 %v231
        %v482 = vpop.f32.mrb[0].mxu0
        %v483 = vadd.f32 0.0, %v482
        %v484 = vpop.f32.mrb[0].mxu0
        %485 = vmatprep.mubr.f32.mxu0 0.0
        %486 = vmatmul.mubr.f32.gmra.mrb[0].mxu0 %v232
        %v487 = vpop.f32.mrb[0].mxu0
        %v488 = vadd.f32 0.0, %v487
        %v489 = vpop.f32.mrb[0].mxu0
        %490 = vmatprep.mubr.f32.mxu0 0.0
        %491 = vmatmul.mubr.f32.gmra.mrb[0].mxu0 %v233
        %v492 = vpop.f32.mrb[0].mxu0
        %v493 = vadd.f32 0.0, %v492
        %v494 = vpop.f32.mrb[0].mxu0
        %495 = vmatprep.mubr.f32.mxu0 0.0
        %496 = vmatmul.mubr.f32.gmra.mrb[0].mxu0 %v234
        %v497 = vpop.f32.mrb[0].mxu0
        %v498 = vadd.f32 0.0, %v497
        %v499 = vpop.f32.mrb[0].mxu0
        %500 = vmatprep.mubr.f32.mxu0 0.0
        %501 = vmatmul.mubr.f32.gmra.mrb[0].mxu0 %v235
        %v502 = vpop.f32.mrb[0].mxu0
        %v503 = vadd.f32 0.0, %v502
        %v504 = vpop.f32.mrb[0].mxu0
        %505 = vmatprep.mubr.f32.mxu0 0.0
        %506 = vmatmul.mubr.f32.gmra.mrb[0].mxu0 %v236
        %v507 = vpop.f32.mrb[0].mxu0
        %v508 = vadd.f32 0.0, %v507
        %v509 = vpop.f32.mrb[0].mxu0
        %510 = vmatprep.mubr.f32.mxu0 0.0
        %511 = vmatmul.mubr.f32.gmra.mrb[0].mxu0 %v237
        %v512 = vpop.f32.mrb[0].mxu0
        %v513 = vadd.f32 0.0, %v512
        %v514 = vpop.f32.mrb[0].mxu0
        %515 = vmatprep.mubr.f32.mxu0 0.0
        %516 = vmatmul.mubr.f32.gmra.mrb[0].mxu0 %v238
        %v517 = vpop.f32.mrb[0].mxu0
        %v518 = vadd.f32 0.0, %v517
        %v519 = vpop.f32.mrb[0].mxu0
        %520 = vmatprep.mubr.f32.mxu0 0.0
        %521 = vmatmul.mubr.f32.gmra.mrb[0].mxu0 %v239
        %v522 = vpop.f32.mrb[0].mxu0
        %v523 = vadd.f32 0.0, %v522
        %v524 = vpop.f32.mrb[0].mxu0
        %525 = vmatprep.mubr.f32.mxu0 0.0
        %526 = vmatmul.mubr.f32.gmra.mrb[0].mxu0 %v240
        %v527 = vpop.f32.mrb[0].mxu0
        %v528 = vadd.f32 0.0, %v527
        %v529 = vpop.f32.mrb[0].mxu0
        %530 = vdwg.mxu0
        %v531 = vsel %vm224, %v453, %v308
        %v532 = vsel %vm224, %v458, %v313
        %v533 = vsel %vm224, %v463, %v318
        %v534 = vsel %vm224, %v468, %v323
        %v535 = vsel %vm224, %v473, %v328
        %v536 = vsel %vm224, %v478, %v333
        %v537 = vsel %vm224, %v483, %v338
        %v538 = vsel %vm224, %v488, %v343
        %v539 = vsel %vm224, %v493, %v348
        %v540 = vsel %vm224, %v498, %v353
        %v541 = vsel %vm224, %v503, %v358
        %v542 = vsel %vm224, %v508, %v363
        %v543 = vsel %vm224, %v513, %v368
        %v544 = vsel %vm224, %v518, %v373
        %v545 = vsel %vm224, %v523, %v378
        %v546 = vsel %vm224, %v528, %v383
        %v547 = vsel %vm224, %v308, %v453
        %v548 = vsel %vm224, %v313, %v458
        %v549 = vsel %vm224, %v318, %v463
        %v550 = vsel %vm224, %v323, %v468
        %v551 = vsel %vm224, %v328, %v473
        %v552 = vsel %vm224, %v333, %v478
        %v553 = vsel %vm224, %v338, %v483
        %v554 = vsel %vm224, %v343, %v488
        %v555 = vsel %vm224, %v348, %v493
        %v556 = vsel %vm224, %v353, %v498
        %v557 = vsel %vm224, %v358, %v503
        %v558 = vsel %vm224, %v363, %v508
        %v559 = vsel %vm224, %v368, %v513
        %v560 = vsel %vm224, %v373, %v518
        %v561 = vsel %vm224, %v378, %v523
        %v562 = vsel %vm224, %v383, %v528
        %v563 = vlaneseq
        %v564 = vshrl.u32 %v563, 7
        %v565 = vadd.s32 %v564, 8
        %v566 = vadd.s32 %v564, 16
        %v567 = vadd.s32 %v564, 24
        %v568 = vadd.s32 %v564, 32
        %v569 = vadd.s32 %v564, 40
        %v570 = vadd.s32 %v564, 48
        %v571 = vadd.s32 %v564, 56
        %v572 = vadd.s32 %v564, 64
        %v573 = vadd.s32 %v564, 72
        %v574 = vadd.s32 %v564, 80
        %v575 = vadd.s32 %v564, 88
        %v576 = vadd.s32 %v564, 96
        %v577 = vadd.s32 %v564, 104
        %v578 = vadd.s32 %v564, 112
        %v579 = vadd.s32 %v564, 120
        %v580 = vstv %s155
        %v581 = vadd.s32 %v580, %v564
        %v582 = vadd.s32 %v580, %v565
        %v583 = vadd.s32 %v580, %v566
        %v584 = vadd.s32 %v580, %v567
        %v585 = vadd.s32 %v580, %v568
        %v586 = vadd.s32 %v580, %v569
        %v587 = vadd.s32 %v580, %v570
        %v588 = vadd.s32 %v580, %v571
        %v589 = vadd.s32 %v580, %v572
        %v590 = vadd.s32 %v580, %v573
        %v591 = vadd.s32 %v580, %v574
        %v592 = vadd.s32 %v580, %v575
        %v593 = vadd.s32 %v580, %v576
        %v594 = vadd.s32 %v580, %v577
        %v595 = vadd.s32 %v580, %v578
        %v596 = vadd.s32 %v580, %v579
        %v597 = vlaneseq
        %v598 = vand.u32 %v597, 127
        %vm599 = vcmp.lt.s32.totalorder %v581, 8
        %vm600 = vcmp.lt.s32.totalorder %v582, 8
        %vm601 = vcmp.lt.s32.totalorder %v583, 8
        %vm602 = vcmp.lt.s32.totalorder %v584, 8
        %vm603 = vcmp.lt.s32.totalorder %v585, 8
        %vm604 = vcmp.lt.s32.totalorder %v586, 8
        %vm605 = vcmp.lt.s32.totalorder %v587, 8
        %vm606 = vcmp.lt.s32.totalorder %v588, 8
        %vm607 = vcmp.lt.s32.totalorder %v589, 8
        %vm608 = vcmp.lt.s32.totalorder %v590, 8
        %vm609 = vcmp.lt.s32.totalorder %v591, 8
        %vm610 = vcmp.lt.s32.totalorder %v592, 8
        %vm611 = vcmp.lt.s32.totalorder %v593, 8
        %vm612 = vcmp.lt.s32.totalorder %v594, 8
        %vm613 = vcmp.lt.s32.totalorder %v595, 8
        %vm614 = vcmp.lt.s32.totalorder %v596, 8
        %vm615 = vcmp.lt.s32.totalorder %v598, 8
        %v616 = vmul.f32 %v189, %v206
        %v617 = vmul.f32 %v190, %v207
        %v618 = vmul.f32 %v191, %v208
        %v619 = vmul.f32 %v192, %v209
        %v620 = vmul.f32 %v193, %v210
        %v621 = vmul.f32 %v194, %v211
        %v622 = vmul.f32 %v195, %v212
        %v623 = vmul.f32 %v196, %v213
        %v624 = vmul.f32 %v197, %v214
        %v625 = vmul.f32 %v198, %v215
        %v626 = vmul.f32 %v199, %v216
        %v627 = vmul.f32 %v200, %v217
        %v628 = vmul.f32 %v201, %v218
        %v629 = vmul.f32 %v202, %v219
        %v630 = vmul.f32 %v203, %v220
        %v631 = vmul.f32 %v204, %v221
        %632 = vadd.xlane.f32.xlu0 %v616
        %v633 = vpop.xlane.xlu0 %632
        %634 = vadd.xlane.f32.xlu0 %v617
        %v635 = vpop.xlane.xlu0 %634
        %636 = vadd.xlane.f32.xlu0 %v618
        %v637 = vpop.xlane.xlu0 %636
        %638 = vadd.xlane.f32.xlu0 %v619
        %v639 = vpop.xlane.xlu0 %638
        %640 = vadd.xlane.f32.xlu0 %v620
        %v641 = vpop.xlane.xlu0 %640
        %642 = vadd.xlane.f32.xlu0 %v621
        %v643 = vpop.xlane.xlu0 %642
        %644 = vadd.xlane.f32.xlu0 %v622
        %v645 = vpop.xlane.xlu0 %644
        %646 = vadd.xlane.f32.xlu0 %v623
        %v647 = vpop.xlane.xlu0 %646
        %648 = vadd.xlane.f32.xlu0 %v624
        %v649 = vpop.xlane.xlu0 %648
        %650 = vadd.xlane.f32.xlu0 %v625
        %v651 = vpop.xlane.xlu0 %650
        %652 = vadd.xlane.f32.xlu0 %v626
        %v653 = vpop.xlane.xlu0 %652
        %654 = vadd.xlane.f32.xlu0 %v627
        %v655 = vpop.xlane.xlu0 %654
        %656 = vadd.xlane.f32.xlu0 %v628
        %v657 = vpop.xlane.xlu0 %656
        %658 = vadd.xlane.f32.xlu0 %v629
        %v659 = vpop.xlane.xlu0 %658
        %660 = vadd.xlane.f32.xlu0 %v630
        %v661 = vpop.xlane.xlu0 %660
        %662 = vadd.xlane.f32.xlu0 %v631
        %v663 = vpop.xlane.xlu0 %662
        %v664 = vsel %vm615, 1, 0
        %vm665 = vcmp.eq.s32.totalorder %v664, 1
        %v666 = vsel %vm665, %v531, -1e+30
        %v667 = vsel %vm665, %v532, -1e+30
        %v668 = vsel %vm665, %v533, -1e+30
        %v669 = vsel %vm665, %v534, -1e+30
        %v670 = vsel %vm665, %v535, -1e+30
        %v671 = vsel %vm665, %v536, -1e+30
        %v672 = vsel %vm665, %v537, -1e+30
        %v673 = vsel %vm665, %v538, -1e+30
        %v674 = vsel %vm665, %v539, -1e+30
        %v675 = vsel %vm665, %v540, -1e+30
        %v676 = vsel %vm665, %v541, -1e+30
        %v677 = vsel %vm665, %v542, -1e+30
        %v678 = vsel %vm665, %v543, -1e+30
        %v679 = vsel %vm665, %v544, -1e+30
        %v680 = vsel %vm665, %v545, -1e+30
        %v681 = vsel %vm665, %v546, -1e+30
        %682 = vmax.xlane.f32.xlu0 %v666
        %v683 = vpop.xlane.xlu0 %682
        %684 = vmax.xlane.f32.xlu0 %v667
        %v685 = vpop.xlane.xlu0 %684
        %686 = vmax.xlane.f32.xlu0 %v668
        %v687 = vpop.xlane.xlu0 %686
        %688 = vmax.xlane.f32.xlu0 %v669
        %v689 = vpop.xlane.xlu0 %688
        %690 = vmax.xlane.f32.xlu0 %v670
        %v691 = vpop.xlane.xlu0 %690
        %692 = vmax.xlane.f32.xlu0 %v671
        %v693 = vpop.xlane.xlu0 %692
        %694 = vmax.xlane.f32.xlu0 %v672
        %v695 = vpop.xlane.xlu0 %694
        %696 = vmax.xlane.f32.xlu0 %v673
        %v697 = vpop.xlane.xlu0 %696
        %698 = vmax.xlane.f32.xlu0 %v674
        %v699 = vpop.xlane.xlu0 %698
        %700 = vmax.xlane.f32.xlu0 %v675
        %v701 = vpop.xlane.xlu0 %700
        %702 = vmax.xlane.f32.xlu0 %v676
        %v703 = vpop.xlane.xlu0 %702
        %704 = vmax.xlane.f32.xlu0 %v677
        %v705 = vpop.xlane.xlu0 %704
        %706 = vmax.xlane.f32.xlu0 %v678
        %v707 = vpop.xlane.xlu0 %706
        %708 = vmax.xlane.f32.xlu0 %v679
        %v709 = vpop.xlane.xlu0 %708
        %710 = vmax.xlane.f32.xlu0 %v680
        %v711 = vpop.xlane.xlu0 %710
        %712 = vmax.xlane.f32.xlu0 %v681
        %v713 = vpop.xlane.xlu0 %712
        %v714 = vsub.f32 %v666, %v683
        %v715 = vsub.f32 %v667, %v685
        %v716 = vsub.f32 %v668, %v687
        %v717 = vsub.f32 %v669, %v689
        %v718 = vsub.f32 %v670, %v691
        %v719 = vsub.f32 %v671, %v693
        %v720 = vsub.f32 %v672, %v695
        %v721 = vsub.f32 %v673, %v697
        %v722 = vsub.f32 %v674, %v699
        %v723 = vsub.f32 %v675, %v701
        %v724 = vsub.f32 %v676, %v703
        %v725 = vsub.f32 %v677, %v705
        %v726 = vsub.f32 %v678, %v707
        %v727 = vsub.f32 %v679, %v709
        %v728 = vsub.f32 %v680, %v711
        %v729 = vsub.f32 %v681, %v713
        %v730 = vmul.f32 %v714, 1.442695
        %v731 = vpow.pop %v730
        %v732 = vmul.f32 %v715, 1.442695
        %v733 = vpow.pop %v732
        %v734 = vmul.f32 %v716, 1.442695
        %v735 = vpow.pop %v734
        %v736 = vmul.f32 %v717, 1.442695
        %v737 = vpow.pop %v736
        %v738 = vmul.f32 %v718, 1.442695
        %v739 = vpow.pop %v738
        %v740 = vmul.f32 %v719, 1.442695
        %v741 = vpow.pop %v740
        %v742 = vmul.f32 %v720, 1.442695
        %v743 = vpow.pop %v742
        %v744 = vmul.f32 %v721, 1.442695
        %v745 = vpow.pop %v744
        %v746 = vmul.f32 %v722, 1.442695
        %v747 = vpow.pop %v746
        %v748 = vmul.f32 %v723, 1.442695
        %v749 = vpow.pop %v748
        %v750 = vmul.f32 %v724, 1.442695
        %v751 = vpow.pop %v750
        %v752 = vmul.f32 %v725, 1.442695
        %v753 = vpow.pop %v752
        %v754 = vmul.f32 %v726, 1.442695
        %v755 = vpow.pop %v754
        %v756 = vmul.f32 %v727, 1.442695
        %v757 = vpow.pop %v756
        %v758 = vmul.f32 %v728, 1.442695
        %v759 = vpow.pop %v758
        %v760 = vmul.f32 %v729, 1.442695
        %v761 = vpow.pop %v760
        %762 = vadd.xlane.f32.xlu0 %v731
        %v763 = vpop.xlane.xlu0 %762
        %764 = vadd.xlane.f32.xlu0 %v733
        %v765 = vpop.xlane.xlu0 %764
        %766 = vadd.xlane.f32.xlu0 %v735
        %v767 = vpop.xlane.xlu0 %766
        %768 = vadd.xlane.f32.xlu0 %v737
        %v769 = vpop.xlane.xlu0 %768
        %770 = vadd.xlane.f32.xlu0 %v739
        %v771 = vpop.xlane.xlu0 %770
        %772 = vadd.xlane.f32.xlu0 %v741
        %v773 = vpop.xlane.xlu0 %772
        %774 = vadd.xlane.f32.xlu0 %v743
        %v775 = vpop.xlane.xlu0 %774
        %776 = vadd.xlane.f32.xlu0 %v745
        %v777 = vpop.xlane.xlu0 %776
        %778 = vadd.xlane.f32.xlu0 %v747
        %v779 = vpop.xlane.xlu0 %778
        %780 = vadd.xlane.f32.xlu0 %v749
        %v781 = vpop.xlane.xlu0 %780
        %782 = vadd.xlane.f32.xlu0 %v751
        %v783 = vpop.xlane.xlu0 %782
        %784 = vadd.xlane.f32.xlu0 %v753
        %v785 = vpop.xlane.xlu0 %784
        %786 = vadd.xlane.f32.xlu0 %v755
        %v787 = vpop.xlane.xlu0 %786
        %788 = vadd.xlane.f32.xlu0 %v757
        %v789 = vpop.xlane.xlu0 %788
        %790 = vadd.xlane.f32.xlu0 %v759
        %v791 = vpop.xlane.xlu0 %790
        %792 = vadd.xlane.f32.xlu0 %v761
        %v793 = vpop.xlane.xlu0 %792
        %v794 = vlog2.pop %v763
        %v795 = vmul.f32 %v794, 0.6931472
        %v796 = vlog2.pop %v765
        %v797 = vmul.f32 %v796, 0.6931472
        %v798 = vlog2.pop %v767
        %v799 = vmul.f32 %v798, 0.6931472
        %v800 = vlog2.pop %v769
        %v801 = vmul.f32 %v800, 0.6931472
        %v802 = vlog2.pop %v771
        %v803 = vmul.f32 %v802, 0.6931472
        %v804 = vlog2.pop %v773
        %v805 = vmul.f32 %v804, 0.6931472
        %v806 = vlog2.pop %v775
        %v807 = vmul.f32 %v806, 0.6931472
        %v808 = vlog2.pop %v777
        %v809 = vmul.f32 %v808, 0.6931472
        %v810 = vlog2.pop %v779
        %v811 = vmul.f32 %v810, 0.6931472
        %v812 = vlog2.pop %v781
        %v813 = vmul.f32 %v812, 0.6931472
        %v814 = vlog2.pop %v783
        %v815 = vmul.f32 %v814, 0.6931472
        %v816 = vlog2.pop %v785
        %v817 = vmul.f32 %v816, 0.6931472
        %v818 = vlog2.pop %v787
        %v819 = vmul.f32 %v818, 0.6931472
        %v820 = vlog2.pop %v789
        %v821 = vmul.f32 %v820, 0.6931472
        %v822 = vlog2.pop %v791
        %v823 = vmul.f32 %v822, 0.6931472
        %v824 = vlog2.pop %v793
        %v825 = vmul.f32 %v824, 0.6931472
        %v826 = vadd.f32 %v683, %v795
        %v827 = vadd.f32 %v685, %v797
        %v828 = vadd.f32 %v687, %v799
        %v829 = vadd.f32 %v689, %v801
        %v830 = vadd.f32 %v691, %v803
        %v831 = vadd.f32 %v693, %v805
        %v832 = vadd.f32 %v695, %v807
        %v833 = vadd.f32 %v697, %v809
        %v834 = vadd.f32 %v699, %v811
        %v835 = vadd.f32 %v701, %v813
        %v836 = vadd.f32 %v703, %v815
        %v837 = vadd.f32 %v705, %v817
        %v838 = vadd.f32 %v707, %v819
        %v839 = vadd.f32 %v709, %v821
        %v840 = vadd.f32 %v711, %v823
        %v841 = vadd.f32 %v713, %v825
        %v842 = vsub.f32 %v826, %v633
        %v843 = vsub.f32 %v827, %v635
        %v844 = vsub.f32 %v828, %v637
        %v845 = vsub.f32 %v829, %v639
        %v846 = vsub.f32 %v830, %v641
        %v847 = vsub.f32 %v831, %v643
        %v848 = vsub.f32 %v832, %v645
        %v849 = vsub.f32 %v833, %v647
        %v850 = vsub.f32 %v834, %v649
        %v851 = vsub.f32 %v835, %v651
        %v852 = vsub.f32 %v836, %v653
        %v853 = vsub.f32 %v837, %v655
        %v854 = vsub.f32 %v838, %v657
        %v855 = vsub.f32 %v839, %v659
        %v856 = vsub.f32 %v840, %v661
        %v857 = vsub.f32 %v841, %v663
        %v858 = vsel %vm599, %v842, 0.0
        %v859 = vsel %vm600, %v843, 0.0
        %v860 = vsel %vm601, %v844, 0.0
        %v861 = vsel %vm602, %v845, 0.0
        %v862 = vsel %vm603, %v846, 0.0
        %v863 = vsel %vm604, %v847, 0.0
        %v864 = vsel %vm605, %v848, 0.0
        %v865 = vsel %vm606, %v849, 0.0
        %v866 = vsel %vm607, %v850, 0.0
        %v867 = vsel %vm608, %v851, 0.0
        %v868 = vsel %vm609, %v852, 0.0
        %v869 = vsel %vm610, %v853, 0.0
        %v870 = vsel %vm611, %v854, 0.0
        %v871 = vsel %vm612, %v855, 0.0
        %v872 = vsel %vm613, %v856, 0.0
        %v873 = vsel %vm614, %v857, 0.0
        %vm874 = vcmask 7168
        %v875 = vsel %vm874, %v858, 0.0
        %v876 = vsel %vm874, %v859, 0.0
        %v877 = vadd.f32 %v875, %v876
        %v878 = vsel %vm874, %v860, 0.0
        %v879 = vadd.f32 %v877, %v878
        %v880 = vsel %vm874, %v861, 0.0
        %v881 = vadd.f32 %v879, %v880
        %v882 = vsel %vm874, %v862, 0.0
        %v883 = vadd.f32 %v881, %v882
        %v884 = vsel %vm874, %v863, 0.0
        %v885 = vadd.f32 %v883, %v884
        %v886 = vsel %vm874, %v864, 0.0
        %v887 = vadd.f32 %v885, %v886
        %v888 = vsel %vm874, %v865, 0.0
        %v889 = vadd.f32 %v887, %v888
        %v890 = vsel %vm874, %v866, 0.0
        %v891 = vadd.f32 %v889, %v890
        %v892 = vsel %vm874, %v867, 0.0
        %v893 = vadd.f32 %v891, %v892
        %v894 = vsel %vm874, %v868, 0.0
        %v895 = vadd.f32 %v893, %v894
        %v896 = vsel %vm874, %v869, 0.0
        %v897 = vadd.f32 %v895, %v896
        %v898 = vsel %vm874, %v870, 0.0
        %v899 = vadd.f32 %v897, %v898
        %v900 = vsel %vm874, %v871, 0.0
        %v901 = vadd.f32 %v899, %v900
        %v902 = vsel %vm874, %v872, 0.0
        %v903 = vadd.f32 %v901, %v902
        %v904 = vsel %vm874, %v873, 0.0
        %v905 = vadd.f32 %v903, %v904
        %906 = vadd.xlane.f32.xlu0 %v905
        %v907 = vpop.xlane.xlu0 %906
        %v908 = vrot.slane %v907, 4
        %v909 = vadd.f32 %v907, %v908
        %v910 = vrot.slane %v909, 2
        %v911 = vadd.f32 %v909, %v910
        %v912 = vrot.slane %v911, 1
        %v913 = vadd.f32 %v911, %v912
        %s914 = vtos %v913
        %vm915 = vcmp.eq.s32.totalorder %v598, %v581
        %vm916 = vcmp.eq.s32.totalorder %v598, %v582
        %vm917 = vcmp.eq.s32.totalorder %v598, %v583
        %vm918 = vcmp.eq.s32.totalorder %v598, %v584
        %vm919 = vcmp.eq.s32.totalorder %v598, %v585
        %vm920 = vcmp.eq.s32.totalorder %v598, %v586
        %vm921 = vcmp.eq.s32.totalorder %v598, %v587
        %vm922 = vcmp.eq.s32.totalorder %v598, %v588
        %vm923 = vcmp.eq.s32.totalorder %v598, %v589
        %vm924 = vcmp.eq.s32.totalorder %v598, %v590
        %vm925 = vcmp.eq.s32.totalorder %v598, %v591
        %vm926 = vcmp.eq.s32.totalorder %v598, %v592
        %vm927 = vcmp.eq.s32.totalorder %v598, %v593
        %vm928 = vcmp.eq.s32.totalorder %v598, %v594
        %vm929 = vcmp.eq.s32.totalorder %v598, %v595
        %vm930 = vcmp.eq.s32.totalorder %v598, %v596
        %vm931 = vcmp.ge.s32.totalorder %v598, %v581
        %vm932 = vcmp.ge.s32.totalorder %v598, %v582
        %vm933 = vcmp.ge.s32.totalorder %v598, %v583
        %vm934 = vcmp.ge.s32.totalorder %v598, %v584
        %vm935 = vcmp.ge.s32.totalorder %v598, %v585
        %vm936 = vcmp.ge.s32.totalorder %v598, %v586
        %vm937 = vcmp.ge.s32.totalorder %v598, %v587
        %vm938 = vcmp.ge.s32.totalorder %v598, %v588
        %vm939 = vcmp.ge.s32.totalorder %v598, %v589
        %vm940 = vcmp.ge.s32.totalorder %v598, %v590
        %vm941 = vcmp.ge.s32.totalorder %v598, %v591
        %vm942 = vcmp.ge.s32.totalorder %v598, %v592
        %vm943 = vcmp.ge.s32.totalorder %v598, %v593
        %vm944 = vcmp.ge.s32.totalorder %v598, %v594
        %vm945 = vcmp.ge.s32.totalorder %v598, %v595
        %vm946 = vcmp.ge.s32.totalorder %v598, %v596
        %vm947 = vmand %vm931, %vm665
        %vm948 = vmand %vm932, %vm665
        %vm949 = vmand %vm933, %vm665
        %vm950 = vmand %vm934, %vm665
        %vm951 = vmand %vm935, %vm665
        %vm952 = vmand %vm936, %vm665
        %vm953 = vmand %vm937, %vm665
        %vm954 = vmand %vm938, %vm665
        %vm955 = vmand %vm939, %vm665
        %vm956 = vmand %vm940, %vm665
        %vm957 = vmand %vm941, %vm665
        %vm958 = vmand %vm942, %vm665
        %vm959 = vmand %vm943, %vm665
        %vm960 = vmand %vm944, %vm665
        %vm961 = vmand %vm945, %vm665
        %vm962 = vmand %vm946, %vm665
        %v963 = vsel %vm947, 1, 0
        %v964 = vsel %vm948, 1, 0
        %v965 = vsel %vm949, 1, 0
        %v966 = vsel %vm950, 1, 0
        %v967 = vsel %vm951, 1, 0
        %v968 = vsel %vm952, 1, 0
        %v969 = vsel %vm953, 1, 0
        %v970 = vsel %vm954, 1, 0
        %v971 = vsel %vm955, 1, 0
        %v972 = vsel %vm956, 1, 0
        %v973 = vsel %vm957, 1, 0
        %v974 = vsel %vm958, 1, 0
        %v975 = vsel %vm959, 1, 0
        %v976 = vsel %vm960, 1, 0
        %v977 = vsel %vm961, 1, 0
        %v978 = vsel %vm962, 1, 0
        %v979 = vcvt.s32.f32 %v963
        %v980 = vcvt.s32.f32 %v964
        %v981 = vcvt.s32.f32 %v965
        %v982 = vcvt.s32.f32 %v966
        %v983 = vcvt.s32.f32 %v967
        %v984 = vcvt.s32.f32 %v968
        %v985 = vcvt.s32.f32 %v969
        %v986 = vcvt.s32.f32 %v970
        %v987 = vcvt.s32.f32 %v971
        %v988 = vcvt.s32.f32 %v972
        %v989 = vcvt.s32.f32 %v973
        %v990 = vcvt.s32.f32 %v974
        %v991 = vcvt.s32.f32 %v975
        %v992 = vcvt.s32.f32 %v976
        %v993 = vcvt.s32.f32 %v977
        %v994 = vcvt.s32.f32 %v978
        %v995 = vand.u32 2147483647, %v547
        %v996 = vand.u32 2147483647, %v548
        %v997 = vand.u32 2147483647, %v549
        %v998 = vand.u32 2147483647, %v550
        %v999 = vand.u32 2147483647, %v551
        %v1000 = vand.u32 2147483647, %v552
        %v1001 = vand.u32 2147483647, %v553
        %v1002 = vand.u32 2147483647, %v554
        %v1003 = vand.u32 2147483647, %v555
        %v1004 = vand.u32 2147483647, %v556
        %v1005 = vand.u32 2147483647, %v557
        %v1006 = vand.u32 2147483647, %v558
        %v1007 = vand.u32 2147483647, %v559
        %v1008 = vand.u32 2147483647, %v560
        %v1009 = vand.u32 2147483647, %v561
        %v1010 = vand.u32 2147483647, %v562
        %v1011 = vsub.f32 0.0, %v995
        %v1012 = vsub.f32 0.0, %v996
        %v1013 = vsub.f32 0.0, %v997
        %v1014 = vsub.f32 0.0, %v998
        %v1015 = vsub.f32 0.0, %v999
        %v1016 = vsub.f32 0.0, %v1000
        %v1017 = vsub.f32 0.0, %v1001
        %v1018 = vsub.f32 0.0, %v1002
        %v1019 = vsub.f32 0.0, %v1003
        %v1020 = vsub.f32 0.0, %v1004
        %v1021 = vsub.f32 0.0, %v1005
        %v1022 = vsub.f32 0.0, %v1006
        %v1023 = vsub.f32 0.0, %v1007
        %v1024 = vsub.f32 0.0, %v1008
        %v1025 = vsub.f32 0.0, %v1009
        %v1026 = vsub.f32 0.0, %v1010
        %v1027 = vmul.f32 %v1011, 1.442695
        %v1028 = vpow.pop %v1027
        %v1029 = vmul.f32 %v1012, 1.442695
        %v1030 = vpow.pop %v1029
        %v1031 = vmul.f32 %v1013, 1.442695
        %v1032 = vpow.pop %v1031
        %v1033 = vmul.f32 %v1014, 1.442695
        %v1034 = vpow.pop %v1033
        %v1035 = vmul.f32 %v1015, 1.442695
        %v1036 = vpow.pop %v1035
        %v1037 = vmul.f32 %v1016, 1.442695
        %v1038 = vpow.pop %v1037
        %v1039 = vmul.f32 %v1017, 1.442695
        %v1040 = vpow.pop %v1039
        %v1041 = vmul.f32 %v1018, 1.442695
        %v1042 = vpow.pop %v1041
        %v1043 = vmul.f32 %v1019, 1.442695
        %v1044 = vpow.pop %v1043
        %v1045 = vmul.f32 %v1020, 1.442695
        %v1046 = vpow.pop %v1045
        %v1047 = vmul.f32 %v1021, 1.442695
        %v1048 = vpow.pop %v1047
        %v1049 = vmul.f32 %v1022, 1.442695
        %v1050 = vpow.pop %v1049
        %v1051 = vmul.f32 %v1023, 1.442695
        %v1052 = vpow.pop %v1051
        %v1053 = vmul.f32 %v1024, 1.442695
        %v1054 = vpow.pop %v1053
        %v1055 = vmul.f32 %v1025, 1.442695
        %v1056 = vpow.pop %v1055
        %v1057 = vmul.f32 %v1026, 1.442695
        %v1058 = vpow.pop %v1057
        %v1059 = vadd.f32 %v1028, 1.0
        %v1060 = vadd.f32 %v1030, 1.0
        %v1061 = vadd.f32 %v1032, 1.0
        %v1062 = vadd.f32 %v1034, 1.0
        %v1063 = vadd.f32 %v1036, 1.0
        %v1064 = vadd.f32 %v1038, 1.0
        %v1065 = vadd.f32 %v1040, 1.0
        %v1066 = vadd.f32 %v1042, 1.0
        %v1067 = vadd.f32 %v1044, 1.0
        %v1068 = vadd.f32 %v1046, 1.0
        %v1069 = vadd.f32 %v1048, 1.0
        %v1070 = vadd.f32 %v1050, 1.0
        %v1071 = vadd.f32 %v1052, 1.0
        %v1072 = vadd.f32 %v1054, 1.0
        %v1073 = vadd.f32 %v1056, 1.0
        %v1074 = vadd.f32 %v1058, 1.0
        %v1075 = vrcp.pop %v1059
        %v1076 = vrcp.pop %v1060
        %v1077 = vrcp.pop %v1061
        %v1078 = vrcp.pop %v1062
        %v1079 = vrcp.pop %v1063
        %v1080 = vrcp.pop %v1064
        %v1081 = vrcp.pop %v1065
        %v1082 = vrcp.pop %v1066
        %v1083 = vrcp.pop %v1067
        %v1084 = vrcp.pop %v1068
        %v1085 = vrcp.pop %v1069
        %v1086 = vrcp.pop %v1070
        %v1087 = vrcp.pop %v1071
        %v1088 = vrcp.pop %v1072
        %v1089 = vrcp.pop %v1073
        %v1090 = vrcp.pop %v1074
        %vm1091 = vcmp.ge.f32.partialorder %v547, 0.0
        %vm1092 = vcmp.ge.f32.partialorder %v548, 0.0
        %vm1093 = vcmp.ge.f32.partialorder %v549, 0.0
        %vm1094 = vcmp.ge.f32.partialorder %v550, 0.0
        %vm1095 = vcmp.ge.f32.partialorder %v551, 0.0
        %vm1096 = vcmp.ge.f32.partialorder %v552, 0.0
        %vm1097 = vcmp.ge.f32.partialorder %v553, 0.0
        %vm1098 = vcmp.ge.f32.partialorder %v554, 0.0
        %vm1099 = vcmp.ge.f32.partialorder %v555, 0.0
        %vm1100 = vcmp.ge.f32.partialorder %v556, 0.0
        %vm1101 = vcmp.ge.f32.partialorder %v557, 0.0
        %vm1102 = vcmp.ge.f32.partialorder %v558, 0.0
        %vm1103 = vcmp.ge.f32.partialorder %v559, 0.0
        %vm1104 = vcmp.ge.f32.partialorder %v560, 0.0
        %vm1105 = vcmp.ge.f32.partialorder %v561, 0.0
        %vm1106 = vcmp.ge.f32.partialorder %v562, 0.0
        %v1107 = vmul.f32 %v1028, %v1075
        %v1108 = vmul.f32 %v1030, %v1076
        %v1109 = vmul.f32 %v1032, %v1077
        %v1110 = vmul.f32 %v1034, %v1078
        %v1111 = vmul.f32 %v1036, %v1079
        %v1112 = vmul.f32 %v1038, %v1080
        %v1113 = vmul.f32 %v1040, %v1081
        %v1114 = vmul.f32 %v1042, %v1082
        %v1115 = vmul.f32 %v1044, %v1083
        %v1116 = vmul.f32 %v1046, %v1084
        %v1117 = vmul.f32 %v1048, %v1085
        %v1118 = vmul.f32 %v1050, %v1086
        %v1119 = vmul.f32 %v1052, %v1087
        %v1120 = vmul.f32 %v1054, %v1088
        %v1121 = vmul.f32 %v1056, %v1089
        %v1122 = vmul.f32 %v1058, %v1090
        %v1123 = vsel %vm1091, %v1075, %v1107
        %v1124 = vsel %vm1092, %v1076, %v1108
        %v1125 = vsel %vm1093, %v1077, %v1109
        %v1126 = vsel %vm1094, %v1078, %v1110
        %v1127 = vsel %vm1095, %v1079, %v1111
        %v1128 = vsel %vm1096, %v1080, %v1112
        %v1129 = vsel %vm1097, %v1081, %v1113
        %v1130 = vsel %vm1098, %v1082, %v1114
        %v1131 = vsel %vm1099, %v1083, %v1115
        %v1132 = vsel %vm1100, %v1084, %v1116
        %v1133 = vsel %vm1101, %v1085, %v1117
        %v1134 = vsel %vm1102, %v1086, %v1118
        %v1135 = vsel %vm1103, %v1087, %v1119
        %v1136 = vsel %vm1104, %v1088, %v1120
        %v1137 = vsel %vm1105, %v1089, %v1121
        %v1138 = vsel %vm1106, %v1090, %v1122
        %v1139 = vsel %vm915, 1.0, %v1123
        %v1140 = vsel %vm916, 1.0, %v1124
        %v1141 = vsel %vm917, 1.0, %v1125
        %v1142 = vsel %vm918, 1.0, %v1126
        %v1143 = vsel %vm919, 1.0, %v1127
        %v1144 = vsel %vm920, 1.0, %v1128
        %v1145 = vsel %vm921, 1.0, %v1129
        %v1146 = vsel %vm922, 1.0, %v1130
        %v1147 = vsel %vm923, 1.0, %v1131
        %v1148 = vsel %vm924, 1.0, %v1132
        %v1149 = vsel %vm925, 1.0, %v1133
        %v1150 = vsel %vm926, 1.0, %v1134
        %v1151 = vsel %vm927, 1.0, %v1135
        %v1152 = vsel %vm928, 1.0, %v1136
        %v1153 = vsel %vm929, 1.0, %v1137
        %v1154 = vsel %vm930, 1.0, %v1138
        %v1155 = vand.u32 2147483647, %v531
        %v1156 = vand.u32 2147483647, %v532
        %v1157 = vand.u32 2147483647, %v533
        %v1158 = vand.u32 2147483647, %v534
        %v1159 = vand.u32 2147483647, %v535
        %v1160 = vand.u32 2147483647, %v536
        %v1161 = vand.u32 2147483647, %v537
        %v1162 = vand.u32 2147483647, %v538
        %v1163 = vand.u32 2147483647, %v539
        %v1164 = vand.u32 2147483647, %v540
        %v1165 = vand.u32 2147483647, %v541
        %v1166 = vand.u32 2147483647, %v542
        %v1167 = vand.u32 2147483647, %v543
        %v1168 = vand.u32 2147483647, %v544
        %v1169 = vand.u32 2147483647, %v545
        %v1170 = vand.u32 2147483647, %v546
        %v1171 = vsub.f32 0.0, %v1155
        %v1172 = vsub.f32 0.0, %v1156
        %v1173 = vsub.f32 0.0, %v1157
        %v1174 = vsub.f32 0.0, %v1158
        %v1175 = vsub.f32 0.0, %v1159
        %v1176 = vsub.f32 0.0, %v1160
        %v1177 = vsub.f32 0.0, %v1161
        %v1178 = vsub.f32 0.0, %v1162
        %v1179 = vsub.f32 0.0, %v1163
        %v1180 = vsub.f32 0.0, %v1164
        %v1181 = vsub.f32 0.0, %v1165
        %v1182 = vsub.f32 0.0, %v1166
        %v1183 = vsub.f32 0.0, %v1167
        %v1184 = vsub.f32 0.0, %v1168
        %v1185 = vsub.f32 0.0, %v1169
        %v1186 = vsub.f32 0.0, %v1170
        %v1187 = vmul.f32 %v1171, 1.442695
        %v1188 = vpow.pop %v1187
        %v1189 = vmul.f32 %v1172, 1.442695
        %v1190 = vpow.pop %v1189
        %v1191 = vmul.f32 %v1173, 1.442695
        %v1192 = vpow.pop %v1191
        %v1193 = vmul.f32 %v1174, 1.442695
        %v1194 = vpow.pop %v1193
        %v1195 = vmul.f32 %v1175, 1.442695
        %v1196 = vpow.pop %v1195
        %v1197 = vmul.f32 %v1176, 1.442695
        %v1198 = vpow.pop %v1197
        %v1199 = vmul.f32 %v1177, 1.442695
        %v1200 = vpow.pop %v1199
        %v1201 = vmul.f32 %v1178, 1.442695
        %v1202 = vpow.pop %v1201
        %v1203 = vmul.f32 %v1179, 1.442695
        %v1204 = vpow.pop %v1203
        %v1205 = vmul.f32 %v1180, 1.442695
        %v1206 = vpow.pop %v1205
        %v1207 = vmul.f32 %v1181, 1.442695
        %v1208 = vpow.pop %v1207
        %v1209 = vmul.f32 %v1182, 1.442695
        %v1210 = vpow.pop %v1209
        %v1211 = vmul.f32 %v1183, 1.442695
        %v1212 = vpow.pop %v1211
        %v1213 = vmul.f32 %v1184, 1.442695
        %v1214 = vpow.pop %v1213
        %v1215 = vmul.f32 %v1185, 1.442695
        %v1216 = vpow.pop %v1215
        %v1217 = vmul.f32 %v1186, 1.442695
        %v1218 = vpow.pop %v1217
        %v1219 = vadd.f32 %v1188, 1.0
        %v1220 = vadd.f32 %v1190, 1.0
        %v1221 = vadd.f32 %v1192, 1.0
        %v1222 = vadd.f32 %v1194, 1.0
        %v1223 = vadd.f32 %v1196, 1.0
        %v1224 = vadd.f32 %v1198, 1.0
        %v1225 = vadd.f32 %v1200, 1.0
        %v1226 = vadd.f32 %v1202, 1.0
        %v1227 = vadd.f32 %v1204, 1.0
        %v1228 = vadd.f32 %v1206, 1.0
        %v1229 = vadd.f32 %v1208, 1.0
        %v1230 = vadd.f32 %v1210, 1.0
        %v1231 = vadd.f32 %v1212, 1.0
        %v1232 = vadd.f32 %v1214, 1.0
        %v1233 = vadd.f32 %v1216, 1.0
        %v1234 = vadd.f32 %v1218, 1.0
        %v1235 = vrcp.pop %v1219
        %v1236 = vrcp.pop %v1220
        %v1237 = vrcp.pop %v1221
        %v1238 = vrcp.pop %v1222
        %v1239 = vrcp.pop %v1223
        %v1240 = vrcp.pop %v1224
        %v1241 = vrcp.pop %v1225
        %v1242 = vrcp.pop %v1226
        %v1243 = vrcp.pop %v1227
        %v1244 = vrcp.pop %v1228
        %v1245 = vrcp.pop %v1229
        %v1246 = vrcp.pop %v1230
        %v1247 = vrcp.pop %v1231
        %v1248 = vrcp.pop %v1232
        %v1249 = vrcp.pop %v1233
        %v1250 = vrcp.pop %v1234
        %vm1251 = vcmp.ge.f32.partialorder %v531, 0.0
        %vm1252 = vcmp.ge.f32.partialorder %v532, 0.0
        %vm1253 = vcmp.ge.f32.partialorder %v533, 0.0
        %vm1254 = vcmp.ge.f32.partialorder %v534, 0.0
        %vm1255 = vcmp.ge.f32.partialorder %v535, 0.0
        %vm1256 = vcmp.ge.f32.partialorder %v536, 0.0
        %vm1257 = vcmp.ge.f32.partialorder %v537, 0.0
        %vm1258 = vcmp.ge.f32.partialorder %v538, 0.0
        %vm1259 = vcmp.ge.f32.partialorder %v539, 0.0
        %vm1260 = vcmp.ge.f32.partialorder %v540, 0.0
        %vm1261 = vcmp.ge.f32.partialorder %v541, 0.0
        %vm1262 = vcmp.ge.f32.partialorder %v542, 0.0
        %vm1263 = vcmp.ge.f32.partialorder %v543, 0.0
        %vm1264 = vcmp.ge.f32.partialorder %v544, 0.0
        %vm1265 = vcmp.ge.f32.partialorder %v545, 0.0
        %vm1266 = vcmp.ge.f32.partialorder %v546, 0.0
        %v1267 = vmul.f32 %v1188, %v1235
        %v1268 = vmul.f32 %v1190, %v1236
        %v1269 = vmul.f32 %v1192, %v1237
        %v1270 = vmul.f32 %v1194, %v1238
        %v1271 = vmul.f32 %v1196, %v1239
        %v1272 = vmul.f32 %v1198, %v1240
        %v1273 = vmul.f32 %v1200, %v1241
        %v1274 = vmul.f32 %v1202, %v1242
        %v1275 = vmul.f32 %v1204, %v1243
        %v1276 = vmul.f32 %v1206, %v1244
        %v1277 = vmul.f32 %v1208, %v1245
        %v1278 = vmul.f32 %v1210, %v1246
        %v1279 = vmul.f32 %v1212, %v1247
        %v1280 = vmul.f32 %v1214, %v1248
        %v1281 = vmul.f32 %v1216, %v1249
        %v1282 = vmul.f32 %v1218, %v1250
        %v1283 = vsel %vm1251, %v1235, %v1267
        %v1284 = vsel %vm1252, %v1236, %v1268
        %v1285 = vsel %vm1253, %v1237, %v1269
        %v1286 = vsel %vm1254, %v1238, %v1270
        %v1287 = vsel %vm1255, %v1239, %v1271
        %v1288 = vsel %vm1256, %v1240, %v1272
        %v1289 = vsel %vm1257, %v1241, %v1273
        %v1290 = vsel %vm1258, %v1242, %v1274
        %v1291 = vsel %vm1259, %v1243, %v1275
        %v1292 = vsel %vm1260, %v1244, %v1276
        %v1293 = vsel %vm1261, %v1245, %v1277
        %v1294 = vsel %vm1262, %v1246, %v1278
        %v1295 = vsel %vm1263, %v1247, %v1279
        %v1296 = vsel %vm1264, %v1248, %v1280
        %v1297 = vsel %vm1265, %v1249, %v1281
        %v1298 = vsel %vm1266, %v1250, %v1282
        %v1299 = vsub.f32 1.0, %v979
        %v1300 = vsub.f32 1.0, %v980
        %v1301 = vsub.f32 1.0, %v981
        %v1302 = vsub.f32 1.0, %v982
        %v1303 = vsub.f32 1.0, %v983
        %v1304 = vsub.f32 1.0, %v984
        %v1305 = vsub.f32 1.0, %v985
        %v1306 = vsub.f32 1.0, %v986
        %v1307 = vsub.f32 1.0, %v987
        %v1308 = vsub.f32 1.0, %v988
        %v1309 = vsub.f32 1.0, %v989
        %v1310 = vsub.f32 1.0, %v990
        %v1311 = vsub.f32 1.0, %v991
        %v1312 = vsub.f32 1.0, %v992
        %v1313 = vsub.f32 1.0, %v993
        %v1314 = vsub.f32 1.0, %v994
        %v1315 = vmul.f32 %v1139, %v1299
        %v1316 = vmul.f32 %v1140, %v1300
        %v1317 = vmul.f32 %v1141, %v1301
        %v1318 = vmul.f32 %v1142, %v1302
        %v1319 = vmul.f32 %v1143, %v1303
        %v1320 = vmul.f32 %v1144, %v1304
        %v1321 = vmul.f32 %v1145, %v1305
        %v1322 = vmul.f32 %v1146, %v1306
        %v1323 = vmul.f32 %v1147, %v1307
        %v1324 = vmul.f32 %v1148, %v1308
        %v1325 = vmul.f32 %v1149, %v1309
        %v1326 = vmul.f32 %v1150, %v1310
        %v1327 = vmul.f32 %v1151, %v1311
        %v1328 = vmul.f32 %v1152, %v1312
        %v1329 = vmul.f32 %v1153, %v1313
        %v1330 = vmul.f32 %v1154, %v1314
        %v1331 = vsub.f32 0.0, %v1139
        %v1332 = vsub.f32 0.0, %v1140
        %v1333 = vsub.f32 0.0, %v1141
        %v1334 = vsub.f32 0.0, %v1142
        %v1335 = vsub.f32 0.0, %v1143
        %v1336 = vsub.f32 0.0, %v1144
        %v1337 = vsub.f32 0.0, %v1145
        %v1338 = vsub.f32 0.0, %v1146
        %v1339 = vsub.f32 0.0, %v1147
        %v1340 = vsub.f32 0.0, %v1148
        %v1341 = vsub.f32 0.0, %v1149
        %v1342 = vsub.f32 0.0, %v1150
        %v1343 = vsub.f32 0.0, %v1151
        %v1344 = vsub.f32 0.0, %v1152
        %v1345 = vsub.f32 0.0, %v1153
        %v1346 = vsub.f32 0.0, %v1154
        %v1347 = vmul.f32 %v1331, 1.442695
        %v1348 = vpow.pop %v1347
        %v1349 = vmul.f32 %v1332, 1.442695
        %v1350 = vpow.pop %v1349
        %v1351 = vmul.f32 %v1333, 1.442695
        %v1352 = vpow.pop %v1351
        %v1353 = vmul.f32 %v1334, 1.442695
        %v1354 = vpow.pop %v1353
        %v1355 = vmul.f32 %v1335, 1.442695
        %v1356 = vpow.pop %v1355
        %v1357 = vmul.f32 %v1336, 1.442695
        %v1358 = vpow.pop %v1357
        %v1359 = vmul.f32 %v1337, 1.442695
        %v1360 = vpow.pop %v1359
        %v1361 = vmul.f32 %v1338, 1.442695
        %v1362 = vpow.pop %v1361
        %v1363 = vmul.f32 %v1339, 1.442695
        %v1364 = vpow.pop %v1363
        %v1365 = vmul.f32 %v1340, 1.442695
        %v1366 = vpow.pop %v1365
        %v1367 = vmul.f32 %v1341, 1.442695
        %v1368 = vpow.pop %v1367
        %v1369 = vmul.f32 %v1342, 1.442695
        %v1370 = vpow.pop %v1369
        %v1371 = vmul.f32 %v1343, 1.442695
        %v1372 = vpow.pop %v1371
        %v1373 = vmul.f32 %v1344, 1.442695
        %v1374 = vpow.pop %v1373
        %v1375 = vmul.f32 %v1345, 1.442695
        %v1376 = vpow.pop %v1375
        %v1377 = vmul.f32 %v1346, 1.442695
        %v1378 = vpow.pop %v1377
        %v1379 = vadd.f32 %v1348, 1.0
        %v1380 = vadd.f32 %v1350, 1.0
        %v1381 = vadd.f32 %v1352, 1.0
        %v1382 = vadd.f32 %v1354, 1.0
        %v1383 = vadd.f32 %v1356, 1.0
        %v1384 = vadd.f32 %v1358, 1.0
        %v1385 = vadd.f32 %v1360, 1.0
        %v1386 = vadd.f32 %v1362, 1.0
        %v1387 = vadd.f32 %v1364, 1.0
        %v1388 = vadd.f32 %v1366, 1.0
        %v1389 = vadd.f32 %v1368, 1.0
        %v1390 = vadd.f32 %v1370, 1.0
        %v1391 = vadd.f32 %v1372, 1.0
        %v1392 = vadd.f32 %v1374, 1.0
        %v1393 = vadd.f32 %v1376, 1.0
        %v1394 = vadd.f32 %v1378, 1.0
        %v1395 = vlog2.pop %v1379
        %v1396 = vmul.f32 %v1395, 0.6931472
        %v1397 = vlog2.pop %v1380
        %v1398 = vmul.f32 %v1397, 0.6931472
        %v1399 = vlog2.pop %v1381
        %v1400 = vmul.f32 %v1399, 0.6931472
        %v1401 = vlog2.pop %v1382
        %v1402 = vmul.f32 %v1401, 0.6931472
        %v1403 = vlog2.pop %v1383
        %v1404 = vmul.f32 %v1403, 0.6931472
        %v1405 = vlog2.pop %v1384
        %v1406 = vmul.f32 %v1405, 0.6931472
        %v1407 = vlog2.pop %v1385
        %v1408 = vmul.f32 %v1407, 0.6931472
        %v1409 = vlog2.pop %v1386
        %v1410 = vmul.f32 %v1409, 0.6931472
        %v1411 = vlog2.pop %v1387
        %v1412 = vmul.f32 %v1411, 0.6931472
        %v1413 = vlog2.pop %v1388
        %v1414 = vmul.f32 %v1413, 0.6931472
        %v1415 = vlog2.pop %v1389
        %v1416 = vmul.f32 %v1415, 0.6931472
        %v1417 = vlog2.pop %v1390
        %v1418 = vmul.f32 %v1417, 0.6931472
        %v1419 = vlog2.pop %v1391
        %v1420 = vmul.f32 %v1419, 0.6931472
        %v1421 = vlog2.pop %v1392
        %v1422 = vmul.f32 %v1421, 0.6931472
        %v1423 = vlog2.pop %v1393
        %v1424 = vmul.f32 %v1423, 0.6931472
        %v1425 = vlog2.pop %v1394
        %v1426 = vmul.f32 %v1425, 0.6931472
        %v1427 = vadd.f32 %v1315, %v1396
        %v1428 = vadd.f32 %v1316, %v1398
        %v1429 = vadd.f32 %v1317, %v1400
        %v1430 = vadd.f32 %v1318, %v1402
        %v1431 = vadd.f32 %v1319, %v1404
        %v1432 = vadd.f32 %v1320, %v1406
        %v1433 = vadd.f32 %v1321, %v1408
        %v1434 = vadd.f32 %v1322, %v1410
        %v1435 = vadd.f32 %v1323, %v1412
        %v1436 = vadd.f32 %v1324, %v1414
        %v1437 = vadd.f32 %v1325, %v1416
        %v1438 = vadd.f32 %v1326, %v1418
        %v1439 = vadd.f32 %v1327, %v1420
        %v1440 = vadd.f32 %v1328, %v1422
        %v1441 = vadd.f32 %v1329, %v1424
        %v1442 = vadd.f32 %v1330, %v1426
        %v1443 = vsub.f32 0.0, %v1283
        %v1444 = vsub.f32 0.0, %v1284
        %v1445 = vsub.f32 0.0, %v1285
        %v1446 = vsub.f32 0.0, %v1286
        %v1447 = vsub.f32 0.0, %v1287
        %v1448 = vsub.f32 0.0, %v1288
        %v1449 = vsub.f32 0.0, %v1289
        %v1450 = vsub.f32 0.0, %v1290
        %v1451 = vsub.f32 0.0, %v1291
        %v1452 = vsub.f32 0.0, %v1292
        %v1453 = vsub.f32 0.0, %v1293
        %v1454 = vsub.f32 0.0, %v1294
        %v1455 = vsub.f32 0.0, %v1295
        %v1456 = vsub.f32 0.0, %v1296
        %v1457 = vsub.f32 0.0, %v1297
        %v1458 = vsub.f32 0.0, %v1298
        %v1459 = vmul.f32 %v1443, 1.442695
        %v1460 = vpow.pop %v1459
        %v1461 = vmul.f32 %v1444, 1.442695
        %v1462 = vpow.pop %v1461
        %v1463 = vmul.f32 %v1445, 1.442695
        %v1464 = vpow.pop %v1463
        %v1465 = vmul.f32 %v1446, 1.442695
        %v1466 = vpow.pop %v1465
        %v1467 = vmul.f32 %v1447, 1.442695
        %v1468 = vpow.pop %v1467
        %v1469 = vmul.f32 %v1448, 1.442695
        %v1470 = vpow.pop %v1469
        %v1471 = vmul.f32 %v1449, 1.442695
        %v1472 = vpow.pop %v1471
        %v1473 = vmul.f32 %v1450, 1.442695
        %v1474 = vpow.pop %v1473
        %v1475 = vmul.f32 %v1451, 1.442695
        %v1476 = vpow.pop %v1475
        %v1477 = vmul.f32 %v1452, 1.442695
        %v1478 = vpow.pop %v1477
        %v1479 = vmul.f32 %v1453, 1.442695
        %v1480 = vpow.pop %v1479
        %v1481 = vmul.f32 %v1454, 1.442695
        %v1482 = vpow.pop %v1481
        %v1483 = vmul.f32 %v1455, 1.442695
        %v1484 = vpow.pop %v1483
        %v1485 = vmul.f32 %v1456, 1.442695
        %v1486 = vpow.pop %v1485
        %v1487 = vmul.f32 %v1457, 1.442695
        %v1488 = vpow.pop %v1487
        %v1489 = vmul.f32 %v1458, 1.442695
        %v1490 = vpow.pop %v1489
        %v1491 = vadd.f32 %v1460, 1.0
        %v1492 = vadd.f32 %v1462, 1.0
        %v1493 = vadd.f32 %v1464, 1.0
        %v1494 = vadd.f32 %v1466, 1.0
        %v1495 = vadd.f32 %v1468, 1.0
        %v1496 = vadd.f32 %v1470, 1.0
        %v1497 = vadd.f32 %v1472, 1.0
        %v1498 = vadd.f32 %v1474, 1.0
        %v1499 = vadd.f32 %v1476, 1.0
        %v1500 = vadd.f32 %v1478, 1.0
        %v1501 = vadd.f32 %v1480, 1.0
        %v1502 = vadd.f32 %v1482, 1.0
        %v1503 = vadd.f32 %v1484, 1.0
        %v1504 = vadd.f32 %v1486, 1.0
        %v1505 = vadd.f32 %v1488, 1.0
        %v1506 = vadd.f32 %v1490, 1.0
        %v1507 = vlog2.pop %v1491
        %v1508 = vmul.f32 %v1507, 0.6931472
        %v1509 = vlog2.pop %v1492
        %v1510 = vmul.f32 %v1509, 0.6931472
        %v1511 = vlog2.pop %v1493
        %v1512 = vmul.f32 %v1511, 0.6931472
        %v1513 = vlog2.pop %v1494
        %v1514 = vmul.f32 %v1513, 0.6931472
        %v1515 = vlog2.pop %v1495
        %v1516 = vmul.f32 %v1515, 0.6931472
        %v1517 = vlog2.pop %v1496
        %v1518 = vmul.f32 %v1517, 0.6931472
        %v1519 = vlog2.pop %v1497
        %v1520 = vmul.f32 %v1519, 0.6931472
        %v1521 = vlog2.pop %v1498
        %v1522 = vmul.f32 %v1521, 0.6931472
        %v1523 = vlog2.pop %v1499
        %v1524 = vmul.f32 %v1523, 0.6931472
        %v1525 = vlog2.pop %v1500
        %v1526 = vmul.f32 %v1525, 0.6931472
        %v1527 = vlog2.pop %v1501
        %v1528 = vmul.f32 %v1527, 0.6931472
        %v1529 = vlog2.pop %v1502
        %v1530 = vmul.f32 %v1529, 0.6931472
        %v1531 = vlog2.pop %v1503
        %v1532 = vmul.f32 %v1531, 0.6931472
        %v1533 = vlog2.pop %v1504
        %v1534 = vmul.f32 %v1533, 0.6931472
        %v1535 = vlog2.pop %v1505
        %v1536 = vmul.f32 %v1535, 0.6931472
        %v1537 = vlog2.pop %v1506
        %v1538 = vmul.f32 %v1537, 0.6931472
        %v1539 = vadd.f32 %v1283, %v1508
        %v1540 = vadd.f32 %v1284, %v1510
        %v1541 = vadd.f32 %v1285, %v1512
        %v1542 = vadd.f32 %v1286, %v1514
        %v1543 = vadd.f32 %v1287, %v1516
        %v1544 = vadd.f32 %v1288, %v1518
        %v1545 = vadd.f32 %v1289, %v1520
        %v1546 = vadd.f32 %v1290, %v1522
        %v1547 = vadd.f32 %v1291, %v1524
        %v1548 = vadd.f32 %v1292, %v1526
        %v1549 = vadd.f32 %v1293, %v1528
        %v1550 = vadd.f32 %v1294, %v1530
        %v1551 = vadd.f32 %v1295, %v1532
        %v1552 = vadd.f32 %v1296, %v1534
        %v1553 = vadd.f32 %v1297, %v1536
        %v1554 = vadd.f32 %v1298, %v1538
        %v1555 = vsel %vm665, %v1427, 0.0
        %v1556 = vsel %vm665, %v1428, 0.0
        %v1557 = vsel %vm665, %v1429, 0.0
        %v1558 = vsel %vm665, %v1430, 0.0
        %v1559 = vsel %vm665, %v1431, 0.0
        %v1560 = vsel %vm665, %v1432, 0.0
        %v1561 = vsel %vm665, %v1433, 0.0
        %v1562 = vsel %vm665, %v1434, 0.0
        %v1563 = vsel %vm665, %v1435, 0.0
        %v1564 = vsel %vm665, %v1436, 0.0
        %v1565 = vsel %vm665, %v1437, 0.0
        %v1566 = vsel %vm665, %v1438, 0.0
        %v1567 = vsel %vm665, %v1439, 0.0
        %v1568 = vsel %vm665, %v1440, 0.0
        %v1569 = vsel %vm665, %v1441, 0.0
        %v1570 = vsel %vm665, %v1442, 0.0
        %v1571 = vsel %vm665, %v1539, 0.0
        %v1572 = vsel %vm665, %v1540, 0.0
        %v1573 = vsel %vm665, %v1541, 0.0
        %v1574 = vsel %vm665, %v1542, 0.0
        %v1575 = vsel %vm665, %v1543, 0.0
        %v1576 = vsel %vm665, %v1544, 0.0
        %v1577 = vsel %vm665, %v1545, 0.0
        %v1578 = vsel %vm665, %v1546, 0.0
        %v1579 = vsel %vm665, %v1547, 0.0
        %v1580 = vsel %vm665, %v1548, 0.0
        %v1581 = vsel %vm665, %v1549, 0.0
        %v1582 = vsel %vm665, %v1550, 0.0
        %v1583 = vsel %vm665, %v1551, 0.0
        %v1584 = vsel %vm665, %v1552, 0.0
        %v1585 = vsel %vm665, %v1553, 0.0
        %v1586 = vsel %vm665, %v1554, 0.0
        %v1587 = vmul.f32 %v1555, %v979
        %v1588 = vmul.f32 %v1556, %v980
        %v1589 = vmul.f32 %v1557, %v981
        %v1590 = vmul.f32 %v1558, %v982
        %v1591 = vmul.f32 %v1559, %v983
        %v1592 = vmul.f32 %v1560, %v984
        %v1593 = vmul.f32 %v1561, %v985
        %v1594 = vmul.f32 %v1562, %v986
        %v1595 = vmul.f32 %v1563, %v987
        %v1596 = vmul.f32 %v1564, %v988
        %v1597 = vmul.f32 %v1565, %v989
        %v1598 = vmul.f32 %v1566, %v990
        %v1599 = vmul.f32 %v1567, %v991
        %v1600 = vmul.f32 %v1568, %v992
        %v1601 = vmul.f32 %v1569, %v993
        %v1602 = vmul.f32 %v1570, %v994
        %1603 = vadd.xlane.f32.xlu0 %v1587
        %v1604 = vpop.xlane.xlu0 %1603
        %1605 = vadd.xlane.f32.xlu0 %v1588
        %v1606 = vpop.xlane.xlu0 %1605
        %1607 = vadd.xlane.f32.xlu0 %v1589
        %v1608 = vpop.xlane.xlu0 %1607
        %1609 = vadd.xlane.f32.xlu0 %v1590
        %v1610 = vpop.xlane.xlu0 %1609
        %1611 = vadd.xlane.f32.xlu0 %v1591
        %v1612 = vpop.xlane.xlu0 %1611
        %1613 = vadd.xlane.f32.xlu0 %v1592
        %v1614 = vpop.xlane.xlu0 %1613
        %1615 = vadd.xlane.f32.xlu0 %v1593
        %v1616 = vpop.xlane.xlu0 %1615
        %1617 = vadd.xlane.f32.xlu0 %v1594
        %v1618 = vpop.xlane.xlu0 %1617
        %1619 = vadd.xlane.f32.xlu0 %v1595
        %v1620 = vpop.xlane.xlu0 %1619
        %1621 = vadd.xlane.f32.xlu0 %v1596
        %v1622 = vpop.xlane.xlu0 %1621
        %1623 = vadd.xlane.f32.xlu0 %v1597
        %v1624 = vpop.xlane.xlu0 %1623
        %1625 = vadd.xlane.f32.xlu0 %v1598
        %v1626 = vpop.xlane.xlu0 %1625
        %1627 = vadd.xlane.f32.xlu0 %v1599
        %v1628 = vpop.xlane.xlu0 %1627
        %1629 = vadd.xlane.f32.xlu0 %v1600
        %v1630 = vpop.xlane.xlu0 %1629
        %1631 = vadd.xlane.f32.xlu0 %v1601
        %v1632 = vpop.xlane.xlu0 %1631
        %1633 = vadd.xlane.f32.xlu0 %v1602
        %v1634 = vpop.xlane.xlu0 %1633
        %1635 = vadd.xlane.f32.xlu0 %v1555
        %v1636 = vpop.xlane.xlu0 %1635
        %1637 = vadd.xlane.f32.xlu0 %v1556
        %v1638 = vpop.xlane.xlu0 %1637
        %1639 = vadd.xlane.f32.xlu0 %v1557
        %v1640 = vpop.xlane.xlu0 %1639
        %1641 = vadd.xlane.f32.xlu0 %v1558
        %v1642 = vpop.xlane.xlu0 %1641
        %1643 = vadd.xlane.f32.xlu0 %v1559
        %v1644 = vpop.xlane.xlu0 %1643
        %1645 = vadd.xlane.f32.xlu0 %v1560
        %v1646 = vpop.xlane.xlu0 %1645
        %1647 = vadd.xlane.f32.xlu0 %v1561
        %v1648 = vpop.xlane.xlu0 %1647
        %1649 = vadd.xlane.f32.xlu0 %v1562
        %v1650 = vpop.xlane.xlu0 %1649
        %1651 = vadd.xlane.f32.xlu0 %v1563
        %v1652 = vpop.xlane.xlu0 %1651
        %1653 = vadd.xlane.f32.xlu0 %v1564
        %v1654 = vpop.xlane.xlu0 %1653
        %1655 = vadd.xlane.f32.xlu0 %v1565
        %v1656 = vpop.xlane.xlu0 %1655
        %1657 = vadd.xlane.f32.xlu0 %v1566
        %v1658 = vpop.xlane.xlu0 %1657
        %1659 = vadd.xlane.f32.xlu0 %v1567
        %v1660 = vpop.xlane.xlu0 %1659
        %1661 = vadd.xlane.f32.xlu0 %v1568
        %v1662 = vpop.xlane.xlu0 %1661
        %1663 = vadd.xlane.f32.xlu0 %v1569
        %v1664 = vpop.xlane.xlu0 %1663
        %1665 = vadd.xlane.f32.xlu0 %v1570
        %v1666 = vpop.xlane.xlu0 %1665
        %1667 = vadd.xlane.f32.xlu0 %v1571
        %v1668 = vpop.xlane.xlu0 %1667
        %1669 = vadd.xlane.f32.xlu0 %v1572
        %v1670 = vpop.xlane.xlu0 %1669
        %1671 = vadd.xlane.f32.xlu0 %v1573
        %v1672 = vpop.xlane.xlu0 %1671
        %1673 = vadd.xlane.f32.xlu0 %v1574
        %v1674 = vpop.xlane.xlu0 %1673
        %1675 = vadd.xlane.f32.xlu0 %v1575
        %v1676 = vpop.xlane.xlu0 %1675
        %1677 = vadd.xlane.f32.xlu0 %v1576
        %v1678 = vpop.xlane.xlu0 %1677
        %1679 = vadd.xlane.f32.xlu0 %v1577
        %v1680 = vpop.xlane.xlu0 %1679
        %1681 = vadd.xlane.f32.xlu0 %v1578
        %v1682 = vpop.xlane.xlu0 %1681
        %1683 = vadd.xlane.f32.xlu0 %v1579
        %v1684 = vpop.xlane.xlu0 %1683
        %1685 = vadd.xlane.f32.xlu0 %v1580
        %v1686 = vpop.xlane.xlu0 %1685
        %1687 = vadd.xlane.f32.xlu0 %v1581
        %v1688 = vpop.xlane.xlu0 %1687
        %1689 = vadd.xlane.f32.xlu0 %v1582
        %v1690 = vpop.xlane.xlu0 %1689
        %1691 = vadd.xlane.f32.xlu0 %v1583
        %v1692 = vpop.xlane.xlu0 %1691
        %1693 = vadd.xlane.f32.xlu0 %v1584
        %v1694 = vpop.xlane.xlu0 %1693
        %1695 = vadd.xlane.f32.xlu0 %v1585
        %v1696 = vpop.xlane.xlu0 %1695
        %1697 = vadd.xlane.f32.xlu0 %v1586
        %v1698 = vpop.xlane.xlu0 %1697
        %v1699 = vadd.f32 %v1636, %v1668
        %v1700 = vadd.f32 %v1638, %v1670
        %v1701 = vadd.f32 %v1640, %v1672
        %v1702 = vadd.f32 %v1642, %v1674
        %v1703 = vadd.f32 %v1644, %v1676
        %v1704 = vadd.f32 %v1646, %v1678
        %v1705 = vadd.f32 %v1648, %v1680
        %v1706 = vadd.f32 %v1650, %v1682
        %v1707 = vadd.f32 %v1652, %v1684
        %v1708 = vadd.f32 %v1654, %v1686
        %v1709 = vadd.f32 %v1656, %v1688
        %v1710 = vadd.f32 %v1658, %v1690
        %v1711 = vadd.f32 %v1660, %v1692
        %v1712 = vadd.f32 %v1662, %v1694
        %v1713 = vadd.f32 %v1664, %v1696
        %v1714 = vadd.f32 %v1666, %v1698
        %v1715 = vsub.f32 %v1699, %v1604
        %v1716 = vsub.f32 %v1700, %v1606
        %v1717 = vsub.f32 %v1701, %v1608
        %v1718 = vsub.f32 %v1702, %v1610
        %v1719 = vsub.f32 %v1703, %v1612
        %v1720 = vsub.f32 %v1704, %v1614
        %v1721 = vsub.f32 %v1705, %v1616
        %v1722 = vsub.f32 %v1706, %v1618
        %v1723 = vsub.f32 %v1707, %v1620
        %v1724 = vsub.f32 %v1708, %v1622
        %v1725 = vsub.f32 %v1709, %v1624
        %v1726 = vsub.f32 %v1710, %v1626
        %v1727 = vsub.f32 %v1711, %v1628
        %v1728 = vsub.f32 %v1712, %v1630
        %v1729 = vsub.f32 %v1713, %v1632
        %v1730 = vsub.f32 %v1714, %v1634
        %v1731 = vsub.s32 8, %v581
        %v1732 = vsub.s32 8, %v582
        %v1733 = vsub.s32 8, %v583
        %v1734 = vsub.s32 8, %v584
        %v1735 = vsub.s32 8, %v585
        %v1736 = vsub.s32 8, %v586
        %v1737 = vsub.s32 8, %v587
        %v1738 = vsub.s32 8, %v588
        %v1739 = vsub.s32 8, %v589
        %v1740 = vsub.s32 8, %v590
        %v1741 = vsub.s32 8, %v591
        %v1742 = vsub.s32 8, %v592
        %v1743 = vsub.s32 8, %v593
        %v1744 = vsub.s32 8, %v594
        %v1745 = vsub.s32 8, %v595
        %v1746 = vsub.s32 8, %v596
        %v1747 = vcvt.s32.f32 %v1731
        %v1748 = vcvt.s32.f32 %v1732
        %v1749 = vcvt.s32.f32 %v1733
        %v1750 = vcvt.s32.f32 %v1734
        %v1751 = vcvt.s32.f32 %v1735
        %v1752 = vcvt.s32.f32 %v1736
        %v1753 = vcvt.s32.f32 %v1737
        %v1754 = vcvt.s32.f32 %v1738
        %v1755 = vcvt.s32.f32 %v1739
        %v1756 = vcvt.s32.f32 %v1740
        %v1757 = vcvt.s32.f32 %v1741
        %v1758 = vcvt.s32.f32 %v1742
        %v1759 = vcvt.s32.f32 %v1743
        %v1760 = vcvt.s32.f32 %v1744
        %v1761 = vcvt.s32.f32 %v1745
        %v1762 = vcvt.s32.f32 %v1746
        %v1763 = vmax.f32 %v1747, 1.0
        %v1764 = vmax.f32 %v1748, 1.0
        %v1765 = vmax.f32 %v1749, 1.0
        %v1766 = vmax.f32 %v1750, 1.0
        %v1767 = vmax.f32 %v1751, 1.0
        %v1768 = vmax.f32 %v1752, 1.0
        %v1769 = vmax.f32 %v1753, 1.0
        %v1770 = vmax.f32 %v1754, 1.0
        %v1771 = vmax.f32 %v1755, 1.0
        %v1772 = vmax.f32 %v1756, 1.0
        %v1773 = vmax.f32 %v1757, 1.0
        %v1774 = vmax.f32 %v1758, 1.0
        %v1775 = vmax.f32 %v1759, 1.0
        %v1776 = vmax.f32 %v1760, 1.0
        %v1777 = vmax.f32 %v1761, 1.0
        %v1778 = vmax.f32 %v1762, 1.0
        %v1779 = vsub.f32 16.0, %v1763
        %v1780 = vsub.f32 16.0, %v1764
        %v1781 = vsub.f32 16.0, %v1765
        %v1782 = vsub.f32 16.0, %v1766
        %v1783 = vsub.f32 16.0, %v1767
        %v1784 = vsub.f32 16.0, %v1768
        %v1785 = vsub.f32 16.0, %v1769
        %v1786 = vsub.f32 16.0, %v1770
        %v1787 = vsub.f32 16.0, %v1771
        %v1788 = vsub.f32 16.0, %v1772
        %v1789 = vsub.f32 16.0, %v1773
        %v1790 = vsub.f32 16.0, %v1774
        %v1791 = vsub.f32 16.0, %v1775
        %v1792 = vsub.f32 16.0, %v1776
        %v1793 = vsub.f32 16.0, %v1777
        %v1794 = vsub.f32 16.0, %v1778
        %v1795 = vmax.f32 %v1779, 1.0
        %v1796 = vmax.f32 %v1780, 1.0
        %v1797 = vmax.f32 %v1781, 1.0
        %v1798 = vmax.f32 %v1782, 1.0
        %v1799 = vmax.f32 %v1783, 1.0
        %v1800 = vmax.f32 %v1784, 1.0
        %v1801 = vmax.f32 %v1785, 1.0
        %v1802 = vmax.f32 %v1786, 1.0
        %v1803 = vmax.f32 %v1787, 1.0
        %v1804 = vmax.f32 %v1788, 1.0
        %v1805 = vmax.f32 %v1789, 1.0
        %v1806 = vmax.f32 %v1790, 1.0
        %v1807 = vmax.f32 %v1791, 1.0
        %v1808 = vmax.f32 %v1792, 1.0
        %v1809 = vmax.f32 %v1793, 1.0
        %v1810 = vmax.f32 %v1794, 1.0
        %v1811 = vrcp.pop %v1763
        %v1812 = vrcp.pop %v1764
        %v1813 = vrcp.pop %v1765
        %v1814 = vrcp.pop %v1766
        %v1815 = vrcp.pop %v1767
        %v1816 = vrcp.pop %v1768
        %v1817 = vrcp.pop %v1769
        %v1818 = vrcp.pop %v1770
        %v1819 = vrcp.pop %v1771
        %v1820 = vrcp.pop %v1772
        %v1821 = vrcp.pop %v1773
        %v1822 = vrcp.pop %v1774
        %v1823 = vrcp.pop %v1775
        %v1824 = vrcp.pop %v1776
        %v1825 = vrcp.pop %v1777
        %v1826 = vrcp.pop %v1778
        %v1827 = vmul.f32 %v1604, %v1811
        %v1828 = vmul.f32 %v1606, %v1812
        %v1829 = vmul.f32 %v1608, %v1813
        %v1830 = vmul.f32 %v1610, %v1814
        %v1831 = vmul.f32 %v1612, %v1815
        %v1832 = vmul.f32 %v1614, %v1816
        %v1833 = vmul.f32 %v1616, %v1817
        %v1834 = vmul.f32 %v1618, %v1818
        %v1835 = vmul.f32 %v1620, %v1819
        %v1836 = vmul.f32 %v1622, %v1820
        %v1837 = vmul.f32 %v1624, %v1821
        %v1838 = vmul.f32 %v1626, %v1822
        %v1839 = vmul.f32 %v1628, %v1823
        %v1840 = vmul.f32 %v1630, %v1824
        %v1841 = vmul.f32 %v1632, %v1825
        %v1842 = vmul.f32 %v1634, %v1826
        %v1843 = vrcp.pop %v1795
        %v1844 = vrcp.pop %v1796
        %v1845 = vrcp.pop %v1797
        %v1846 = vrcp.pop %v1798
        %v1847 = vrcp.pop %v1799
        %v1848 = vrcp.pop %v1800
        %v1849 = vrcp.pop %v1801
        %v1850 = vrcp.pop %v1802
        %v1851 = vrcp.pop %v1803
        %v1852 = vrcp.pop %v1804
        %v1853 = vrcp.pop %v1805
        %v1854 = vrcp.pop %v1806
        %v1855 = vrcp.pop %v1807
        %v1856 = vrcp.pop %v1808
        %v1857 = vrcp.pop %v1809
        %v1858 = vrcp.pop %v1810
        %v1859 = vmul.f32 %v1715, %v1843
        %v1860 = vmul.f32 %v1716, %v1844
        %v1861 = vmul.f32 %v1717, %v1845
        %v1862 = vmul.f32 %v1718, %v1846
        %v1863 = vmul.f32 %v1719, %v1847
        %v1864 = vmul.f32 %v1720, %v1848
        %v1865 = vmul.f32 %v1721, %v1849
        %v1866 = vmul.f32 %v1722, %v1850
        %v1867 = vmul.f32 %v1723, %v1851
        %v1868 = vmul.f32 %v1724, %v1852
        %v1869 = vmul.f32 %v1725, %v1853
        %v1870 = vmul.f32 %v1726, %v1854
        %v1871 = vmul.f32 %v1727, %v1855
        %v1872 = vmul.f32 %v1728, %v1856
        %v1873 = vmul.f32 %v1729, %v1857
        %v1874 = vmul.f32 %v1730, %v1858
        %v1875 = vadd.f32 %v1827, %v1859
        %v1876 = vadd.f32 %v1828, %v1860
        %v1877 = vadd.f32 %v1829, %v1861
        %v1878 = vadd.f32 %v1830, %v1862
        %v1879 = vadd.f32 %v1831, %v1863
        %v1880 = vadd.f32 %v1832, %v1864
        %v1881 = vadd.f32 %v1833, %v1865
        %v1882 = vadd.f32 %v1834, %v1866
        %v1883 = vadd.f32 %v1835, %v1867
        %v1884 = vadd.f32 %v1836, %v1868
        %v1885 = vadd.f32 %v1837, %v1869
        %v1886 = vadd.f32 %v1838, %v1870
        %v1887 = vadd.f32 %v1839, %v1871
        %v1888 = vadd.f32 %v1840, %v1872
        %v1889 = vadd.f32 %v1841, %v1873
        %v1890 = vadd.f32 %v1842, %v1874
        %v1891 = vsel %vm599, %v1875, 0.0
        %v1892 = vsel %vm600, %v1876, 0.0
        %v1893 = vsel %vm601, %v1877, 0.0
        %v1894 = vsel %vm602, %v1878, 0.0
        %v1895 = vsel %vm603, %v1879, 0.0
        %v1896 = vsel %vm604, %v1880, 0.0
        %v1897 = vsel %vm605, %v1881, 0.0
        %v1898 = vsel %vm606, %v1882, 0.0
        %v1899 = vsel %vm607, %v1883, 0.0
        %v1900 = vsel %vm608, %v1884, 0.0
        %v1901 = vsel %vm609, %v1885, 0.0
        %v1902 = vsel %vm610, %v1886, 0.0
        %v1903 = vsel %vm611, %v1887, 0.0
        %v1904 = vsel %vm612, %v1888, 0.0
        %v1905 = vsel %vm613, %v1889, 0.0
        %v1906 = vsel %vm614, %v1890, 0.0
        %v1907 = vsel %vm874, %v1891, 0.0
        %v1908 = vsel %vm874, %v1892, 0.0
        %v1909 = vadd.f32 %v1907, %v1908
        %v1910 = vsel %vm874, %v1893, 0.0
        %v1911 = vadd.f32 %v1909, %v1910
        %v1912 = vsel %vm874, %v1894, 0.0
        %v1913 = vadd.f32 %v1911, %v1912
        %v1914 = vsel %vm874, %v1895, 0.0
        %v1915 = vadd.f32 %v1913, %v1914
        %v1916 = vsel %vm874, %v1896, 0.0
        %v1917 = vadd.f32 %v1915, %v1916
        %v1918 = vsel %vm874, %v1897, 0.0
        %v1919 = vadd.f32 %v1917, %v1918
        %v1920 = vsel %vm874, %v1898, 0.0
        %v1921 = vadd.f32 %v1919, %v1920
        %v1922 = vsel %vm874, %v1899, 0.0
        %v1923 = vadd.f32 %v1921, %v1922
        %v1924 = vsel %vm874, %v1900, 0.0
        %v1925 = vadd.f32 %v1923, %v1924
        %v1926 = vsel %vm874, %v1901, 0.0
        %v1927 = vadd.f32 %v1925, %v1926
        %v1928 = vsel %vm874, %v1902, 0.0
        %v1929 = vadd.f32 %v1927, %v1928
        %v1930 = vsel %vm874, %v1903, 0.0
        %v1931 = vadd.f32 %v1929, %v1930
        %v1932 = vsel %vm874, %v1904, 0.0
        %v1933 = vadd.f32 %v1931, %v1932
        %v1934 = vsel %vm874, %v1905, 0.0
        %v1935 = vadd.f32 %v1933, %v1934
        %v1936 = vsel %vm874, %v1906, 0.0
        %v1937 = vadd.f32 %v1935, %v1936
        %1938 = vadd.xlane.f32.xlu0 %v1937
        %v1939 = vpop.xlane.xlu0 %1938
        %v1940 = vrot.slane %v1939, 4
        %v1941 = vadd.f32 %v1939, %v1940
        %v1942 = vrot.slane %v1941, 2
        %v1943 = vadd.f32 %v1941, %v1942
        %v1944 = vrot.slane %v1943, 1
        %v1945 = vadd.f32 %v1943, %v1944
        %s1946 = vtos %v1945
        %vm1947 = vcmp.eq.s32.totalorder %v564, 0
        %vm1948 = vcmp.eq.s32.totalorder %v598, 0
        %vm1949 = vmand %vm1947, %vm1948
        %v1950 = vstv %s914
        %v1951 = vsel %vm1949, %v1950, 0.0
        %vm1952 = vcmp.eq.s32.totalorder %v598, 1
        %vm1953 = vmand %vm1947, %vm1952
        %v1954 = vstv %s1946
        %v1955 = vsel %vm1953, %v1954, 0.0
        %v1956 = vadd.f32 %v1951, %v1955
        %1957 = vst [vmem:[%s151] sm:$0xff] %v1956
        %s1958 = sand.u32 %s68, 1
        %s1959 = scalar_lea.sflag [#allocation4], %s1958
        %s1960 = sand.u32 %s68, 1
        %s1961 = smul.addr %s1960, 8
        %s1962 = scalar_lea.vmem [#allocation7], %s1961
        // Predicated region
        $region37: #{tpu_custom_call.1} parent=27 // pred_check
          %p1963 = pneg %p78
        $region38: #{tpu_custom_call.1} parent=27 // pred_check_branch
          %1965 = sbr.rel (%p1963) target = $region40
        $region39: #{tpu_custom_call.1} parent=27 // pred_region
          %s1967 = ssub.s32 128, 128
          %1968 = vsyncadd %s1959, %s1967
          %s1969 = smul.addr %s18, 128
          %s1970 = scalar_lea.hbm %s2, %s1969
          %s1972 = sshll.u32 %s1962, 4
          %s1973 = int_to_ptr.vmem [resolvable:$true] %s1972
          %1975 = dma.vmem_to_hbm [thread:$0]  %s1973, 128, %s1970, %s1959
        $region40: #{tpu_custom_call.1} parent=27 // pred_fallthru
          _
      $region28: #{tpu_custom_call.1} parent=5 // pred_fallthru
        _
      %p1976 = scmp.le.s32.totalorder 2, %s13
      // Predicated region
      $region41: #{tpu_custom_call.1} parent=5 // pred_check
        %p1977 = pneg %p1976
      $region42: #{tpu_custom_call.1} parent=5 // pred_check_branch
        %1979 = sbr.rel (%p1977) target = $region44
      $region43: #{tpu_custom_call.1} parent=5 // pred_region
        %s1980 = ssub.s32 %s13, 2
        // Predicated region
        $region45: #{tpu_custom_call.1} parent=43 // pred_check
          %p1981 = pneg %p84
        $region46: #{tpu_custom_call.1} parent=43 // pred_check_branch
          %1983 = sbr.rel (%p1981) target = $region48
        $region47: #{tpu_custom_call.1} parent=43 // pred_region
          %s1984 = sand.u32 %s69, 1
          %s1985 = scalar_lea.sflag [#allocation4], %s1984
          %s1986 = sand.u32 %s69, 1
          %s1987 = smul.addr %s1986, 8
          %s1988 = scalar_lea.vmem [#allocation7], %s1987
          %1989 = dma.done %s1985, 128
        $region48: #{tpu_custom_call.1} parent=43 // pred_fallthru
          _
      $region44: #{tpu_custom_call.1} parent=5 // pred_fallthru
        _
    $region6: #{tpu_custom_call.1} parent=1 // loop_footer
      %s17 = sadd.s32 1, %s13
    $region7: #{tpu_custom_call.1} parent=1 // loop_footer_branch
      %12 = sbr.rel target = $region3
    $region8: #{tpu_custom_call.1} parent=1 // loop_exit
      _
    %1990 = vsyncpa [#allocation3], 1
    %s1991 = scalar_lea.sflag [#allocation3], 1
    %1992 = vsyncpa %s1991, 1
    %1993 = vsyncpa [#allocation6], 1
    %1994 = vsyncpa [#allocation4], 1
    %s1995 = scalar_lea.sflag [#allocation4], 1
    %1996 = vsyncpa %s1995, 1

</llo_original>
